<compile_context>
chip_gen: v5e
topology: v5e:2x2
jax: 0.10.0
libtpu: 0.0.40
codegen_flags: <defaults>
</compile_context>

<pallas_src>
import numpy as np
import jax
import jax.numpy as jnp
from jax.experimental import pallas as pl
from jax.experimental.pallas import tpu as pltpu


# ----------------------------------------------------------------------------
# Fused forward: conv1 -> conv2 -> fc -> q1 -> q2, all inside one kernel.
# ----------------------------------------------------------------------------
def curl_policy_forward(params, x_nchw, *, block_m=256):
    """Equivalent of CURL_Policy.forward: q_net(representation(x)). One kernel launch."""
    geom = params["geom"]
    cin, hw, k, s = geom["cin"], geom["hw"], geom["k"], geom["stride"]
    oh1 = (hw - k) // s + 1          # conv1 output rows/cols (7)
    oh2 = (oh1 - k) // s + 1         # conv2 output rows/cols (3)

    ws, bs = params["ws"], params["bs"]
    w1, w2, w3, w4, w5 = ws
    n1 = w1.shape[1]                 # oh1 * c1out  (56)
    n2 = w2.shape[1]                 # oh2 * c2out  (48)
    n_out = w5.shape[1]

    batch = x_nchw.shape[0]
    assert x_nchw.shape[1:] == (cin, hw, hw), x_nchw.shape
    assert block_m % 8 == 0
    tm = batch if batch <= block_m else block_m
    grid = (pl.cdiv(batch, tm),)

    def kernel(x_ref, w1r, b1r, w2r, b2r, w3r, b3r, w4r, b4r, w5r, b5r, o_ref):
        cdt = w1r.dtype                                   # bf16 compute dtype
        row_cache = {}

        def get_row(ci, h):                               # (tm, hw) input row, loaded once
            if (ci, h) not in row_cache:
                row_cache[(ci, h)] = x_ref[:, ci, h, :]
            return row_cache[(ci, h)]

        # ---- conv1: one MXU matmul per output row r, column taps folded into w1 ----
        h1 = []
        for r in range(oh1):
            cols = []
            for ci in range(cin):
                for ki in range(k):
                    cols.append(get_row(ci, s * r + ki))  # (tm, hw)
            lhs = jnp.concatenate(cols, axis=-1).astype(cdt)          # (tm, cin*k*hw)
            acc = jnp.dot(lhs, w1r[...], preferred_element_type=jnp.float32)
            h1.append(jnp.maximum(acc + b1r[...], 0.0).astype(cdt))   # (tm, n1) bf16

        # ---- conv2 (per output row r2) fused with the fc reduction over r2 ----
        acc3 = None
        for r2 in range(oh2):
            lhs2 = jnp.concatenate([h1[s * r2 + ki] for ki in range(k)], axis=-1)  # (tm, k*n1)
            acc2 = jnp.dot(lhs2, w2r[...], preferred_element_type=jnp.float32)
            y = jnp.maximum(acc2 + b2r[...], 0.0).astype(cdt)          # (tm, n2) bf16
            w3_chunk = w3r[r2 * n2:(r2 + 1) * n2, :]                   # (n2, hidden)
            part = jnp.dot(y, w3_chunk, preferred_element_type=jnp.float32)
            acc3 = part if acc3 is None else acc3 + part

        # ---- fc + q_net MLP ----
        h3 = jnp.maximum(acc3 + b3r[...], 0.0).astype(cdt)             # (tm, hidden)
        h4 = jnp.maximum(jnp.dot(h3, w4r[...], preferred_element_type=jnp.float32)
                         + b4r[...], 0.0).astype(cdt)                  # (tm, hidden)
        out = jnp.dot(h4, w5r[...], preferred_element_type=jnp.float32) + b5r[...]
        o_ref[...] = out.astype(o_ref.dtype)

    in_specs = [pl.BlockSpec((tm, cin, hw, hw), lambda m: (m, 0, 0, 0))]
    args = [x_nchw]
    for w, b in zip(ws, bs):
        in_specs.append(pl.BlockSpec(w.shape, lambda m: (0, 0)))   # whole weight, VMEM-resident
        in_specs.append(pl.BlockSpec(b.shape, lambda m: (0, 0)))
        args += [w, b]

    return pl.pallas_call(
        kernel,
        out_shape=jax.ShapeDtypeStruct((batch, n_out), jnp.float32),
        grid=grid,
        in_specs=in_specs,
        out_specs=pl.BlockSpec((tm, n_out), lambda m: (m, 0)),
        compiler_params=pltpu.CompilerParams(dimension_semantics=("parallel",)),
    )(*args)


# ----------------------------------------------------------------------------
# One-time parameter preparation (outside the per-forward hot path).
# ----------------------------------------------------------------------------
def init_raw_params(key, in_ch=4, hidden=32, n_actions=6):
    """Deterministic synthetic parameters in the original torch layouts."""
    ks = jax.random.split(key, 10)
    sc = 0.1
    return {
        "conv1_w": sc * jax.random.normal(ks[0], (8, in_ch, 3, 3), jnp.float32),
        "conv1_b": sc * jax.random.normal(ks[1], (8,), jnp.float32),
        "conv2_w": sc * jax.random.normal(ks[2], (16, 8, 3, 3), jnp.float32),
        "conv2_b": sc * jax.random.normal(ks[3], (16,), jnp.float32),
        "fc_w": sc * jax.random.normal(ks[4], (hidden, 16 * 3 * 3), jnp.float32),  # torch (out,in)
        "fc_b": sc * jax.random.normal(ks[5], (hidden,), jnp.float32),
        "q1_w": sc * jax.random.normal(ks[6], (hidden, hidden), jnp.float32),
        "q1_b": sc * jax.random.normal(ks[7], (hidden,), jnp.float32),
        "q2_w": sc * jax.random.normal(ks[8], (n_actions, hidden), jnp.float32),
        "q2_b": sc * jax.random.normal(ks[9], (n_actions,), jnp.float32),
    }


def prepare_params(raw, *, spatial, compute_dtype=jnp.bfloat16):
    """Lower torch-layout params to the fused-kernel layout (runs once, not per forward).

    Only the column-tap (kj / width) structure of each conv is folded into the weight
    matrices (row taps and channels are handled exactly by the kernel's row concatenation),
    so the resident weight footprint is ~50 KB bf16 instead of the ~930 KB Toeplitz form.
    """
    c1w = np.asarray(raw["conv1_w"], np.float32)   # (c1, cin, k, k)
    c1b = np.asarray(raw["conv1_b"], np.float32)
    c2w = np.asarray(raw["conv2_w"], np.float32)   # (c2, c1, k, k)
    c2b = np.asarray(raw["conv2_b"], np.float32)
    fcw = np.asarray(raw["fc_w"], np.float32)      # (hidden, c2*oh2*ow2) torch (out,in)
    fcb = np.asarray(raw["fc_b"], np.float32)

    c1, cin, k, _ = c1w.shape
    c2 = c2w.shape[0]
    s = 2
    hw = spatial
    oh1 = (hw - k) // s + 1                        # 7
    oh2 = (oh1 - k) // s + 1                       # 3
    hidden = fcw.shape[0]
    assert fcw.shape[1] == c2 * oh2 * oh2

    # conv1 fold: rows (ci, ki, w), cols (c, co);  W1[ci,ki,w, c,co] = c1w[co,ci,ki,w-2c]
    W1 = np.zeros((cin, k, hw, oh1, c1), np.float32)
    for ci in range(cin):
        for ki in range(k):
            for c in range(oh1):
                for kj in range(k):
                    W1[ci, ki, s * c + kj, c, :] = c1w[:, ci, ki, kj]
    W1 = W1.reshape(cin * k * hw, oh1 * c1)
    b1 = np.tile(c1b, oh1)                          # index (c, co) -> c*c1 + co

    # conv2 fold: rows (ki, c, ci2), cols (c2, co2); W2[ki,c,ci2, c2,co2] = c2w[co2,ci2,ki,c-2c2]
    W2 = np.zeros((k, oh1, c1, oh2, c2), np.float32)
    for ki in range(k):
        for c2i in range(oh2):
            for kj in range(k):
                c = s * c2i + kj
                for ci2 in range(c1):
                    W2[ki, c, ci2, c2i, :] = c2w[:, ci2, ki, kj]
    W2 = W2.reshape(k * oh1 * c1, oh2 * c2)
    b2 = np.tile(c2b, oh2)                          # index (c2, co2) -> c2*c2out + co2

    # fc permute: our feature order is (r2, c2, co2); torch flatten order is (co2, r2, c2)
    W3 = np.zeros((oh2, oh2, c2, hidden), np.float32)
    for r2 in range(oh2):
        for c2i in range(oh2):
            for co2 in range(c2):
                W3[r2, c2i, co2, :] = fcw[:, co2 * (oh2 * oh2) + r2 * oh2 + c2i]
    W3 = W3.reshape(oh2 * oh2 * c2, hidden)

    W4 = np.asarray(raw["q1_w"], np.float32).T      # (hidden, hidden)
    W5 = np.asarray(raw["q2_w"], np.float32).T      # (hidden, n_actions)

    mats = (W1, W2, W3, W4, W5)
    biases = (b1, b2, fcb, np.asarray(raw["q1_b"], np.float32),
              np.asarray(raw["q2_b"], np.float32))
    ws = tuple(jnp.asarray(m, compute_dtype) for m in mats)
    bs = tuple(jnp.asarray(np.asarray(b, np.float32).reshape(1, -1)) for b in biases)
    return {"ws": ws, "bs": bs,
            "geom": {"cin": cin, "hw": hw, "k": k, "stride": s}}


# ----------------------------------------------------------------------------
# Pure-JAX f32 reference (sanity check only).
# ----------------------------------------------------------------------------
def reference_forward(raw, x_nchw):
    dn = ("NCHW", "OIHW", "NCHW")
    h = jax.lax.conv_general_dilated(x_nchw, raw["conv1_w"], (2, 2), "VALID",
                                     dimension_numbers=dn)
    h = jax.nn.relu(h + raw["conv1_b"][None, :, None, None])
    h = jax.lax.conv_general_dilated(h, raw["conv2_w"], (2, 2), "VALID",
                                     dimension_numbers=dn)
    h = jax.nn.relu(h + raw["conv2_b"][None, :, None, None])
    f = h.reshape(h.shape[0], -1)
    f = jax.nn.relu(f @ raw["fc_w"].T + raw["fc_b"])
    z = jax.nn.relu(f @ raw["q1_w"].T + raw["q1_b"])
    return z @ raw["q2_w"].T + raw["q2_b"]


if __name__ == "__main__":
    key = jax.random.PRNGKey(0)
    k_param, k_x = jax.random.split(key)

    batch, in_ch, spatial = 2, 4, 16
    hidden, n_actions = 32, 6

    raw = init_raw_params(k_param, in_ch=in_ch, hidden=hidden, n_actions=n_actions)
    params = prepare_params(raw, spatial=spatial)          # one-time lowering
    x = jax.random.normal(k_x, (batch, in_ch, spatial, spatial), jnp.float32)

    q_values = curl_policy_forward(params, x)
    jax.block_until_ready(q_values)
    assert q_values.shape == (batch, n_actions), q_values.shape
    assert q_values.dtype == jnp.float32

    # Loose-tolerance check vs a pure-JAX f32 reference (kernel runs weights and
    # inter-layer activations in bf16, so the input is effectively quantized too).
    q_ref = reference_forward(raw, x)
    max_err = float(jnp.max(jnp.abs(q_values - q_ref)))
    assert max_err < 1e-1, f"mismatch vs reference: max abs err = {max_err}"
    print("KERNEL_OK")
</pallas_src>

<mosaic_0001>
module attributes {stable_mosaic.version = 11 : i64} {
  func.func @kernel(%arg0: i32, %arg1: memref<2x4x16x16xf32, #tpu.memory_space<vmem>>, %arg2: memref<192x56xbf16, #tpu.memory_space<vmem>>, %arg3: memref<1x56xf32, #tpu.memory_space<vmem>>, %arg4: memref<168x48xbf16, #tpu.memory_space<vmem>>, %arg5: memref<1x48xf32, #tpu.memory_space<vmem>>, %arg6: memref<144x32xbf16, #tpu.memory_space<vmem>>, %arg7: memref<1x32xf32, #tpu.memory_space<vmem>>, %arg8: memref<32x32xbf16, #tpu.memory_space<vmem>>, %arg9: memref<1x32xf32, #tpu.memory_space<vmem>>, %arg10: memref<32x6xbf16, #tpu.memory_space<vmem>>, %arg11: memref<1x6xf32, #tpu.memory_space<vmem>>, %arg12: memref<2x6xf32, #tpu.memory_space<vmem>>) attributes {dimension_semantics = [#tpu.dimension_semantics<parallel>], iteration_bounds = array<i64: 1>, scalar_prefetch = 0 : i64, scratch_operands = 0 : i64, tpu.core_type = #tpu.core_type<tc>, window_params = [{transform_indices = @transform_0, window_bounds = array<i64: 2, 4, 16, 16>}, {pipeline_mode = #tpu.pipeline_mode<synchronous>, transform_indices = @transform_1, window_bounds = array<i64: 192, 56>}, {pipeline_mode = #tpu.pipeline_mode<synchronous>, transform_indices = @transform_2, window_bounds = array<i64: 1, 56>}, {pipeline_mode = #tpu.pipeline_mode<synchronous>, transform_indices = @transform_3, window_bounds = array<i64: 168, 48>}, {pipeline_mode = #tpu.pipeline_mode<synchronous>, transform_indices = @transform_4, window_bounds = array<i64: 1, 48>}, {pipeline_mode = #tpu.pipeline_mode<synchronous>, transform_indices = @transform_5, window_bounds = array<i64: 144, 32>}, {pipeline_mode = #tpu.pipeline_mode<synchronous>, transform_indices = @transform_6, window_bounds = array<i64: 1, 32>}, {pipeline_mode = #tpu.pipeline_mode<synchronous>, transform_indices = @transform_7, window_bounds = array<i64: 32, 32>}, {pipeline_mode = #tpu.pipeline_mode<synchronous>, transform_indices = @transform_8, window_bounds = array<i64: 1, 32>}, {pipeline_mode = #tpu.pipeline_mode<synchronous>, transform_indices = @transform_9, window_bounds = array<i64: 32, 6>}, {pipeline_mode = #tpu.pipeline_mode<synchronous>, transform_indices = @transform_10, window_bounds = array<i64: 1, 6>}, {transform_indices = @transform_11, window_bounds = array<i64: 2, 6>}]} {
    %c0 = arith.constant 0 : index
    %c0_0 = arith.constant 0 : index
    %c0_1 = arith.constant 0 : index
    %c0_2 = arith.constant 0 : index
    %0 = vector.load %arg1[%c0, %c0_0, %c0_1, %c0_2] : memref<2x4x16x16xf32, #tpu.memory_space<vmem>>, vector<2x1x1x16xf32>
    %1 = vector.shape_cast %0 : vector<2x1x1x16xf32> to vector<2x16xf32>
    %c0_3 = arith.constant 0 : index
    %c0_4 = arith.constant 0 : index
    %c1 = arith.constant 1 : index
    %c0_5 = arith.constant 0 : index
    %2 = vector.load %arg1[%c0_3, %c0_4, %c1, %c0_5] : memref<2x4x16x16xf32, #tpu.memory_space<vmem>>, vector<2x1x1x16xf32>
    %3 = vector.shape_cast %2 : vector<2x1x1x16xf32> to vector<2x16xf32>
    %c0_6 = arith.constant 0 : index
    %c0_7 = arith.constant 0 : index
    %c2 = arith.constant 2 : index
    %c0_8 = arith.constant 0 : index
    %4 = vector.load %arg1[%c0_6, %c0_7, %c2, %c0_8] : memref<2x4x16x16xf32, #tpu.memory_space<vmem>>, vector<2x1x1x16xf32>
    %5 = vector.shape_cast %4 : vector<2x1x1x16xf32> to vector<2x16xf32>
    %c0_9 = arith.constant 0 : index
    %c1_10 = arith.constant 1 : index
    %c0_11 = arith.constant 0 : index
    %c0_12 = arith.constant 0 : index
    %6 = vector.load %arg1[%c0_9, %c1_10, %c0_11, %c0_12] : memref<2x4x16x16xf32, #tpu.memory_space<vmem>>, vector<2x1x1x16xf32>
    %7 = vector.shape_cast %6 : vector<2x1x1x16xf32> to vector<2x16xf32>
    %c0_13 = arith.constant 0 : index
    %c1_14 = arith.constant 1 : index
    %c1_15 = arith.constant 1 : index
    %c0_16 = arith.constant 0 : index
    %8 = vector.load %arg1[%c0_13, %c1_14, %c1_15, %c0_16] : memref<2x4x16x16xf32, #tpu.memory_space<vmem>>, vector<2x1x1x16xf32>
    %9 = vector.shape_cast %8 : vector<2x1x1x16xf32> to vector<2x16xf32>
    %c0_17 = arith.constant 0 : index
    %c1_18 = arith.constant 1 : index
    %c2_19 = arith.constant 2 : index
    %c0_20 = arith.constant 0 : index
    %10 = vector.load %arg1[%c0_17, %c1_18, %c2_19, %c0_20] : memref<2x4x16x16xf32, #tpu.memory_space<vmem>>, vector<2x1x1x16xf32>
    %11 = vector.shape_cast %10 : vector<2x1x1x16xf32> to vector<2x16xf32>
    %c0_21 = arith.constant 0 : index
    %c2_22 = arith.constant 2 : index
    %c0_23 = arith.constant 0 : index
    %c0_24 = arith.constant 0 : index
    %12 = vector.load %arg1[%c0_21, %c2_22, %c0_23, %c0_24] : memref<2x4x16x16xf32, #tpu.memory_space<vmem>>, vector<2x1x1x16xf32>
    %13 = vector.shape_cast %12 : vector<2x1x1x16xf32> to vector<2x16xf32>
    %c0_25 = arith.constant 0 : index
    %c2_26 = arith.constant 2 : index
    %c1_27 = arith.constant 1 : index
    %c0_28 = arith.constant 0 : index
    %14 = vector.load %arg1[%c0_25, %c2_26, %c1_27, %c0_28] : memref<2x4x16x16xf32, #tpu.memory_space<vmem>>, vector<2x1x1x16xf32>
    %15 = vector.shape_cast %14 : vector<2x1x1x16xf32> to vector<2x16xf32>
    %c0_29 = arith.constant 0 : index
    %c2_30 = arith.constant 2 : index
    %c2_31 = arith.constant 2 : index
    %c0_32 = arith.constant 0 : index
    %16 = vector.load %arg1[%c0_29, %c2_30, %c2_31, %c0_32] : memref<2x4x16x16xf32, #tpu.memory_space<vmem>>, vector<2x1x1x16xf32>
    %17 = vector.shape_cast %16 : vector<2x1x1x16xf32> to vector<2x16xf32>
    %c0_33 = arith.constant 0 : index
    %c3 = arith.constant 3 : index
    %c0_34 = arith.constant 0 : index
    %c0_35 = arith.constant 0 : index
    %18 = vector.load %arg1[%c0_33, %c3, %c0_34, %c0_35] : memref<2x4x16x16xf32, #tpu.memory_space<vmem>>, vector<2x1x1x16xf32>
    %19 = vector.shape_cast %18 : vector<2x1x1x16xf32> to vector<2x16xf32>
    %c0_36 = arith.constant 0 : index
    %c3_37 = arith.constant 3 : index
    %c1_38 = arith.constant 1 : index
    %c0_39 = arith.constant 0 : index
    %20 = vector.load %arg1[%c0_36, %c3_37, %c1_38, %c0_39] : memref<2x4x16x16xf32, #tpu.memory_space<vmem>>, vector<2x1x1x16xf32>
    %21 = vector.shape_cast %20 : vector<2x1x1x16xf32> to vector<2x16xf32>
    %c0_40 = arith.constant 0 : index
    %c3_41 = arith.constant 3 : index
    %c2_42 = arith.constant 2 : index
    %c0_43 = arith.constant 0 : index
    %22 = vector.load %arg1[%c0_40, %c3_41, %c2_42, %c0_43] : memref<2x4x16x16xf32, #tpu.memory_space<vmem>>, vector<2x1x1x16xf32>
    %23 = vector.shape_cast %22 : vector<2x1x1x16xf32> to vector<2x16xf32>
    %24 = tpu.concatenate %1, %3, %5, %7, %9, %11, %13, %15, %17, %19, %21, %23 in 1 : vector<2x16xf32>, vector<2x16xf32>, vector<2x16xf32>, vector<2x16xf32>, vector<2x16xf32>, vector<2x16xf32>, vector<2x16xf32>, vector<2x16xf32>, vector<2x16xf32>, vector<2x16xf32>, vector<2x16xf32>, vector<2x16xf32> -> vector<2x192xf32>
    %25 = arith.truncf %24 : vector<2x192xf32> to vector<2x192xbf16>
    %c0_44 = arith.constant 0 : index
    %c0_45 = arith.constant 0 : index
    %26 = vector.load %arg2[%c0_44, %c0_45] : memref<192x56xbf16, #tpu.memory_space<vmem>>, vector<192x56xbf16>
    %cst = arith.constant dense<0.000000e+00> : vector<2x56xf32>
    %27 = tpu.matmul %25, %26, %cst {dimension_numbers = #tpu.dot_dimension_numbers<[1], [0], [0], [1], [0, 0, 1, 1], [], []>} : vector<2x192xbf16>, vector<192x56xbf16>, vector<2x56xf32> -> vector<2x56xf32>
    %c0_46 = arith.constant 0 : index
    %c0_47 = arith.constant 0 : index
    %28 = vector.load %arg3[%c0_46, %c0_47] : memref<1x56xf32, #tpu.memory_space<vmem>>, vector<1x56xf32>
    %29 = vector.broadcast %28 : vector<1x56xf32> to vector<2x56xf32>
    %30 = arith.addf %27, %29 : vector<2x56xf32>
    %cst_48 = arith.constant 0.000000e+00 : f32
    %31 = vector.broadcast %cst_48 : f32 to vector<2x56xf32>
    %32 = arith.maximumf %30, %31 : vector<2x56xf32>
    %33 = arith.truncf %32 : vector<2x56xf32> to vector<2x56xbf16>
    %c0_49 = arith.constant 0 : index
    %c0_50 = arith.constant 0 : index
    %c3_51 = arith.constant 3 : index
    %c0_52 = arith.constant 0 : index
    %34 = vector.load %arg1[%c0_49, %c0_50, %c3_51, %c0_52] : memref<2x4x16x16xf32, #tpu.memory_space<vmem>>, vector<2x1x1x16xf32>
    %35 = vector.shape_cast %34 : vector<2x1x1x16xf32> to vector<2x16xf32>
    %c0_53 = arith.constant 0 : index
    %c0_54 = arith.constant 0 : index
    %c4 = arith.constant 4 : index
    %c0_55 = arith.constant 0 : index
    %36 = vector.load %arg1[%c0_53, %c0_54, %c4, %c0_55] : memref<2x4x16x16xf32, #tpu.memory_space<vmem>>, vector<2x1x1x16xf32>
    %37 = vector.shape_cast %36 : vector<2x1x1x16xf32> to vector<2x16xf32>
    %c0_56 = arith.constant 0 : index
    %c1_57 = arith.constant 1 : index
    %c3_58 = arith.constant 3 : index
    %c0_59 = arith.constant 0 : index
    %38 = vector.load %arg1[%c0_56, %c1_57, %c3_58, %c0_59] : memref<2x4x16x16xf32, #tpu.memory_space<vmem>>, vector<2x1x1x16xf32>
    %39 = vector.shape_cast %38 : vector<2x1x1x16xf32> to vector<2x16xf32>
    %c0_60 = arith.constant 0 : index
    %c1_61 = arith.constant 1 : index
    %c4_62 = arith.constant 4 : index
    %c0_63 = arith.constant 0 : index
    %40 = vector.load %arg1[%c0_60, %c1_61, %c4_62, %c0_63] : memref<2x4x16x16xf32, #tpu.memory_space<vmem>>, vector<2x1x1x16xf32>
    %41 = vector.shape_cast %40 : vector<2x1x1x16xf32> to vector<2x16xf32>
    %c0_64 = arith.constant 0 : index
    %c2_65 = arith.constant 2 : index
    %c3_66 = arith.constant 3 : index
    %c0_67 = arith.constant 0 : index
    %42 = vector.load %arg1[%c0_64, %c2_65, %c3_66, %c0_67] : memref<2x4x16x16xf32, #tpu.memory_space<vmem>>, vector<2x1x1x16xf32>
    %43 = vector.shape_cast %42 : vector<2x1x1x16xf32> to vector<2x16xf32>
    %c0_68 = arith.constant 0 : index
    %c2_69 = arith.constant 2 : index
    %c4_70 = arith.constant 4 : index
    %c0_71 = arith.constant 0 : index
    %44 = vector.load %arg1[%c0_68, %c2_69, %c4_70, %c0_71] : memref<2x4x16x16xf32, #tpu.memory_space<vmem>>, vector<2x1x1x16xf32>
    %45 = vector.shape_cast %44 : vector<2x1x1x16xf32> to vector<2x16xf32>
    %c0_72 = arith.constant 0 : index
    %c3_73 = arith.constant 3 : index
    %c3_74 = arith.constant 3 : index
    %c0_75 = arith.constant 0 : index
    %46 = vector.load %arg1[%c0_72, %c3_73, %c3_74, %c0_75] : memref<2x4x16x16xf32, #tpu.memory_space<vmem>>, vector<2x1x1x16xf32>
    %47 = vector.shape_cast %46 : vector<2x1x1x16xf32> to vector<2x16xf32>
    %c0_76 = arith.constant 0 : index
    %c3_77 = arith.constant 3 : index
    %c4_78 = arith.constant 4 : index
    %c0_79 = arith.constant 0 : index
    %48 = vector.load %arg1[%c0_76, %c3_77, %c4_78, %c0_79] : memref<2x4x16x16xf32, #tpu.memory_space<vmem>>, vector<2x1x1x16xf32>
    %49 = vector.shape_cast %48 : vector<2x1x1x16xf32> to vector<2x16xf32>
    %50 = tpu.concatenate %5, %35, %37, %11, %39, %41, %17, %43, %45, %23, %47, %49 in 1 : vector<2x16xf32>, vector<2x16xf32>, vector<2x16xf32>, vector<2x16xf32>, vector<2x16xf32>, vector<2x16xf32>, vector<2x16xf32>, vector<2x16xf32>, vector<2x16xf32>, vector<2x16xf32>, vector<2x16xf32>, vector<2x16xf32> -> vector<2x192xf32>
    %51 = arith.truncf %50 : vector<2x192xf32> to vector<2x192xbf16>
    %c0_80 = arith.constant 0 : index
    %c0_81 = arith.constant 0 : index
    %52 = vector.load %arg2[%c0_80, %c0_81] : memref<192x56xbf16, #tpu.memory_space<vmem>>, vector<192x56xbf16>
    %cst_82 = arith.constant dense<0.000000e+00> : vector<2x56xf32>
    %53 = tpu.matmul %51, %52, %cst_82 {dimension_numbers = #tpu.dot_dimension_numbers<[1], [0], [0], [1], [0, 0, 1, 1], [], []>} : vector<2x192xbf16>, vector<192x56xbf16>, vector<2x56xf32> -> vector<2x56xf32>
    %c0_83 = arith.constant 0 : index
    %c0_84 = arith.constant 0 : index
    %54 = vector.load %arg3[%c0_83, %c0_84] : memref<1x56xf32, #tpu.memory_space<vmem>>, vector<1x56xf32>
    %55 = vector.broadcast %54 : vector<1x56xf32> to vector<2x56xf32>
    %56 = arith.addf %53, %55 : vector<2x56xf32>
    %cst_85 = arith.constant 0.000000e+00 : f32
    %57 = vector.broadcast %cst_85 : f32 to vector<2x56xf32>
    %58 = arith.maximumf %56, %57 : vector<2x56xf32>
    %59 = arith.truncf %58 : vector<2x56xf32> to vector<2x56xbf16>
    %c0_86 = arith.constant 0 : index
    %c0_87 = arith.constant 0 : index
    %c5 = arith.constant 5 : index
    %c0_88 = arith.constant 0 : index
    %60 = vector.load %arg1[%c0_86, %c0_87, %c5, %c0_88] : memref<2x4x16x16xf32, #tpu.memory_space<vmem>>, vector<2x1x1x16xf32>
    %61 = vector.shape_cast %60 : vector<2x1x1x16xf32> to vector<2x16xf32>
    %c0_89 = arith.constant 0 : index
    %c0_90 = arith.constant 0 : index
    %c6 = arith.constant 6 : index
    %c0_91 = arith.constant 0 : index
    %62 = vector.load %arg1[%c0_89, %c0_90, %c6, %c0_91] : memref<2x4x16x16xf32, #tpu.memory_space<vmem>>, vector<2x1x1x16xf32>
    %63 = vector.shape_cast %62 : vector<2x1x1x16xf32> to vector<2x16xf32>
    %c0_92 = arith.constant 0 : index
    %c1_93 = arith.constant 1 : index
    %c5_94 = arith.constant 5 : index
    %c0_95 = arith.constant 0 : index
    %64 = vector.load %arg1[%c0_92, %c1_93, %c5_94, %c0_95] : memref<2x4x16x16xf32, #tpu.memory_space<vmem>>, vector<2x1x1x16xf32>
    %65 = vector.shape_cast %64 : vector<2x1x1x16xf32> to vector<2x16xf32>
    %c0_96 = arith.constant 0 : index
    %c1_97 = arith.constant 1 : index
    %c6_98 = arith.constant 6 : index
    %c0_99 = arith.constant 0 : index
    %66 = vector.load %arg1[%c0_96, %c1_97, %c6_98, %c0_99] : memref<2x4x16x16xf32, #tpu.memory_space<vmem>>, vector<2x1x1x16xf32>
    %67 = vector.shape_cast %66 : vector<2x1x1x16xf32> to vector<2x16xf32>
    %c0_100 = arith.constant 0 : index
    %c2_101 = arith.constant 2 : index
    %c5_102 = arith.constant 5 : index
    %c0_103 = arith.constant 0 : index
    %68 = vector.load %arg1[%c0_100, %c2_101, %c5_102, %c0_103] : memref<2x4x16x16xf32, #tpu.memory_space<vmem>>, vector<2x1x1x16xf32>
    %69 = vector.shape_cast %68 : vector<2x1x1x16xf32> to vector<2x16xf32>
    %c0_104 = arith.constant 0 : index
    %c2_105 = arith.constant 2 : index
    %c6_106 = arith.constant 6 : index
    %c0_107 = arith.constant 0 : index
    %70 = vector.load %arg1[%c0_104, %c2_105, %c6_106, %c0_107] : memref<2x4x16x16xf32, #tpu.memory_space<vmem>>, vector<2x1x1x16xf32>
    %71 = vector.shape_cast %70 : vector<2x1x1x16xf32> to vector<2x16xf32>
    %c0_108 = arith.constant 0 : index
    %c3_109 = arith.constant 3 : index
    %c5_110 = arith.constant 5 : index
    %c0_111 = arith.constant 0 : index
    %72 = vector.load %arg1[%c0_108, %c3_109, %c5_110, %c0_111] : memref<2x4x16x16xf32, #tpu.memory_space<vmem>>, vector<2x1x1x16xf32>
    %73 = vector.shape_cast %72 : vector<2x1x1x16xf32> to vector<2x16xf32>
    %c0_112 = arith.constant 0 : index
    %c3_113 = arith.constant 3 : index
    %c6_114 = arith.constant 6 : index
    %c0_115 = arith.constant 0 : index
    %74 = vector.load %arg1[%c0_112, %c3_113, %c6_114, %c0_115] : memref<2x4x16x16xf32, #tpu.memory_space<vmem>>, vector<2x1x1x16xf32>
    %75 = vector.shape_cast %74 : vector<2x1x1x16xf32> to vector<2x16xf32>
    %76 = tpu.concatenate %37, %61, %63, %41, %65, %67, %45, %69, %71, %49, %73, %75 in 1 : vector<2x16xf32>, vector<2x16xf32>, vector<2x16xf32>, vector<2x16xf32>, vector<2x16xf32>, vector<2x16xf32>, vector<2x16xf32>, vector<2x16xf32>, vector<2x16xf32>, vector<2x16xf32>, vector<2x16xf32>, vector<2x16xf32> -> vector<2x192xf32>
    %77 = arith.truncf %76 : vector<2x192xf32> to vector<2x192xbf16>
    %c0_116 = arith.constant 0 : index
    %c0_117 = arith.constant 0 : index
    %78 = vector.load %arg2[%c0_116, %c0_117] : memref<192x56xbf16, #tpu.memory_space<vmem>>, vector<192x56xbf16>
    %cst_118 = arith.constant dense<0.000000e+00> : vector<2x56xf32>
    %79 = tpu.matmul %77, %78, %cst_118 {dimension_numbers = #tpu.dot_dimension_numbers<[1], [0], [0], [1], [0, 0, 1, 1], [], []>} : vector<2x192xbf16>, vector<192x56xbf16>, vector<2x56xf32> -> vector<2x56xf32>
    %c0_119 = arith.constant 0 : index
    %c0_120 = arith.constant 0 : index
    %80 = vector.load %arg3[%c0_119, %c0_120] : memref<1x56xf32, #tpu.memory_space<vmem>>, vector<1x56xf32>
    %81 = vector.broadcast %80 : vector<1x56xf32> to vector<2x56xf32>
    %82 = arith.addf %79, %81 : vector<2x56xf32>
    %cst_121 = arith.constant 0.000000e+00 : f32
    %83 = vector.broadcast %cst_121 : f32 to vector<2x56xf32>
    %84 = arith.maximumf %82, %83 : vector<2x56xf32>
    %85 = arith.truncf %84 : vector<2x56xf32> to vector<2x56xbf16>
    %c0_122 = arith.constant 0 : index
    %c0_123 = arith.constant 0 : index
    %c7 = arith.constant 7 : index
    %c0_124 = arith.constant 0 : index
    %86 = vector.load %arg1[%c0_122, %c0_123, %c7, %c0_124] : memref<2x4x16x16xf32, #tpu.memory_space<vmem>>, vector<2x1x1x16xf32>
    %87 = vector.shape_cast %86 : vector<2x1x1x16xf32> to vector<2x16xf32>
    %c0_125 = arith.constant 0 : index
    %c0_126 = arith.constant 0 : index
    %c8 = arith.constant 8 : index
    %c0_127 = arith.constant 0 : index
    %88 = vector.load %arg1[%c0_125, %c0_126, %c8, %c0_127] : memref<2x4x16x16xf32, #tpu.memory_space<vmem>>, vector<2x1x1x16xf32>
    %89 = vector.shape_cast %88 : vector<2x1x1x16xf32> to vector<2x16xf32>
    %c0_128 = arith.constant 0 : index
    %c1_129 = arith.constant 1 : index
    %c7_130 = arith.constant 7 : index
    %c0_131 = arith.constant 0 : index
    %90 = vector.load %arg1[%c0_128, %c1_129, %c7_130, %c0_131] : memref<2x4x16x16xf32, #tpu.memory_space<vmem>>, vector<2x1x1x16xf32>
    %91 = vector.shape_cast %90 : vector<2x1x1x16xf32> to vector<2x16xf32>
    %c0_132 = arith.constant 0 : index
    %c1_133 = arith.constant 1 : index
    %c8_134 = arith.constant 8 : index
    %c0_135 = arith.constant 0 : index
    %92 = vector.load %arg1[%c0_132, %c1_133, %c8_134, %c0_135] : memref<2x4x16x16xf32, #tpu.memory_space<vmem>>, vector<2x1x1x16xf32>
    %93 = vector.shape_cast %92 : vector<2x1x1x16xf32> to vector<2x16xf32>
    %c0_136 = arith.constant 0 : index
    %c2_137 = arith.constant 2 : index
    %c7_138 = arith.constant 7 : index
    %c0_139 = arith.constant 0 : index
    %94 = vector.load %arg1[%c0_136, %c2_137, %c7_138, %c0_139] : memref<2x4x16x16xf32, #tpu.memory_space<vmem>>, vector<2x1x1x16xf32>
    %95 = vector.shape_cast %94 : vector<2x1x1x16xf32> to vector<2x16xf32>
    %c0_140 = arith.constant 0 : index
    %c2_141 = arith.constant 2 : index
    %c8_142 = arith.constant 8 : index
    %c0_143 = arith.constant 0 : index
    %96 = vector.load %arg1[%c0_140, %c2_141, %c8_142, %c0_143] : memref<2x4x16x16xf32, #tpu.memory_space<vmem>>, vector<2x1x1x16xf32>
    %97 = vector.shape_cast %96 : vector<2x1x1x16xf32> to vector<2x16xf32>
    %c0_144 = arith.constant 0 : index
    %c3_145 = arith.constant 3 : index
    %c7_146 = arith.constant 7 : index
    %c0_147 = arith.constant 0 : index
    %98 = vector.load %arg1[%c0_144, %c3_145, %c7_146, %c0_147] : memref<2x4x16x16xf32, #tpu.memory_space<vmem>>, vector<2x1x1x16xf32>
    %99 = vector.shape_cast %98 : vector<2x1x1x16xf32> to vector<2x16xf32>
    %c0_148 = arith.constant 0 : index
    %c3_149 = arith.constant 3 : index
    %c8_150 = arith.constant 8 : index
    %c0_151 = arith.constant 0 : index
    %100 = vector.load %arg1[%c0_148, %c3_149, %c8_150, %c0_151] : memref<2x4x16x16xf32, #tpu.memory_space<vmem>>, vector<2x1x1x16xf32>
    %101 = vector.shape_cast %100 : vector<2x1x1x16xf32> to vector<2x16xf32>
    %102 = tpu.concatenate %63, %87, %89, %67, %91, %93, %71, %95, %97, %75, %99, %101 in 1 : vector<2x16xf32>, vector<2x16xf32>, vector<2x16xf32>, vector<2x16xf32>, vector<2x16xf32>, vector<2x16xf32>, vector<2x16xf32>, vector<2x16xf32>, vector<2x16xf32>, vector<2x16xf32>, vector<2x16xf32>, vector<2x16xf32> -> vector<2x192xf32>
    %103 = arith.truncf %102 : vector<2x192xf32> to vector<2x192xbf16>
    %c0_152 = arith.constant 0 : index
    %c0_153 = arith.constant 0 : index
    %104 = vector.load %arg2[%c0_152, %c0_153] : memref<192x56xbf16, #tpu.memory_space<vmem>>, vector<192x56xbf16>
    %cst_154 = arith.constant dense<0.000000e+00> : vector<2x56xf32>
    %105 = tpu.matmul %103, %104, %cst_154 {dimension_numbers = #tpu.dot_dimension_numbers<[1], [0], [0], [1], [0, 0, 1, 1], [], []>} : vector<2x192xbf16>, vector<192x56xbf16>, vector<2x56xf32> -> vector<2x56xf32>
    %c0_155 = arith.constant 0 : index
    %c0_156 = arith.constant 0 : index
    %106 = vector.load %arg3[%c0_155, %c0_156] : memref<1x56xf32, #tpu.memory_space<vmem>>, vector<1x56xf32>
    %107 = vector.broadcast %106 : vector<1x56xf32> to vector<2x56xf32>
    %108 = arith.addf %105, %107 : vector<2x56xf32>
    %cst_157 = arith.constant 0.000000e+00 : f32
    %109 = vector.broadcast %cst_157 : f32 to vector<2x56xf32>
    %110 = arith.maximumf %108, %109 : vector<2x56xf32>
    %111 = arith.truncf %110 : vector<2x56xf32> to vector<2x56xbf16>
    %c0_158 = arith.constant 0 : index
    %c0_159 = arith.constant 0 : index
    %c9 = arith.constant 9 : index
    %c0_160 = arith.constant 0 : index
    %112 = vector.load %arg1[%c0_158, %c0_159, %c9, %c0_160] : memref<2x4x16x16xf32, #tpu.memory_space<vmem>>, vector<2x1x1x16xf32>
    %113 = vector.shape_cast %112 : vector<2x1x1x16xf32> to vector<2x16xf32>
    %c0_161 = arith.constant 0 : index
    %c0_162 = arith.constant 0 : index
    %c10 = arith.constant 10 : index
    %c0_163 = arith.constant 0 : index
    %114 = vector.load %arg1[%c0_161, %c0_162, %c10, %c0_163] : memref<2x4x16x16xf32, #tpu.memory_space<vmem>>, vector<2x1x1x16xf32>
    %115 = vector.shape_cast %114 : vector<2x1x1x16xf32> to vector<2x16xf32>
    %c0_164 = arith.constant 0 : index
    %c1_165 = arith.constant 1 : index
    %c9_166 = arith.constant 9 : index
    %c0_167 = arith.constant 0 : index
    %116 = vector.load %arg1[%c0_164, %c1_165, %c9_166, %c0_167] : memref<2x4x16x16xf32, #tpu.memory_space<vmem>>, vector<2x1x1x16xf32>
    %117 = vector.shape_cast %116 : vector<2x1x1x16xf32> to vector<2x16xf32>
    %c0_168 = arith.constant 0 : index
    %c1_169 = arith.constant 1 : index
    %c10_170 = arith.constant 10 : index
    %c0_171 = arith.constant 0 : index
    %118 = vector.load %arg1[%c0_168, %c1_169, %c10_170, %c0_171] : memref<2x4x16x16xf32, #tpu.memory_space<vmem>>, vector<2x1x1x16xf32>
    %119 = vector.shape_cast %118 : vector<2x1x1x16xf32> to vector<2x16xf32>
    %c0_172 = arith.constant 0 : index
    %c2_173 = arith.constant 2 : index
    %c9_174 = arith.constant 9 : index
    %c0_175 = arith.constant 0 : index
    %120 = vector.load %arg1[%c0_172, %c2_173, %c9_174, %c0_175] : memref<2x4x16x16xf32, #tpu.memory_space<vmem>>, vector<2x1x1x16xf32>
    %121 = vector.shape_cast %120 : vector<2x1x1x16xf32> to vector<2x16xf32>
    %c0_176 = arith.constant 0 : index
    %c2_177 = arith.constant 2 : index
    %c10_178 = arith.constant 10 : index
    %c0_179 = arith.constant 0 : index
    %122 = vector.load %arg1[%c0_176, %c2_177, %c10_178, %c0_179] : memref<2x4x16x16xf32, #tpu.memory_space<vmem>>, vector<2x1x1x16xf32>
    %123 = vector.shape_cast %122 : vector<2x1x1x16xf32> to vector<2x16xf32>
    %c0_180 = arith.constant 0 : index
    %c3_181 = arith.constant 3 : index
    %c9_182 = arith.constant 9 : index
    %c0_183 = arith.constant 0 : index
    %124 = vector.load %arg1[%c0_180, %c3_181, %c9_182, %c0_183] : memref<2x4x16x16xf32, #tpu.memory_space<vmem>>, vector<2x1x1x16xf32>
    %125 = vector.shape_cast %124 : vector<2x1x1x16xf32> to vector<2x16xf32>
    %c0_184 = arith.constant 0 : index
    %c3_185 = arith.constant 3 : index
    %c10_186 = arith.constant 10 : index
    %c0_187 = arith.constant 0 : index
    %126 = vector.load %arg1[%c0_184, %c3_185, %c10_186, %c0_187] : memref<2x4x16x16xf32, #tpu.memory_space<vmem>>, vector<2x1x1x16xf32>
    %127 = vector.shape_cast %126 : vector<2x1x1x16xf32> to vector<2x16xf32>
    %128 = tpu.concatenate %89, %113, %115, %93, %117, %119, %97, %121, %123, %101, %125, %127 in 1 : vector<2x16xf32>, vector<2x16xf32>, vector<2x16xf32>, vector<2x16xf32>, vector<2x16xf32>, vector<2x16xf32>, vector<2x16xf32>, vector<2x16xf32>, vector<2x16xf32>, vector<2x16xf32>, vector<2x16xf32>, vector<2x16xf32> -> vector<2x192xf32>
    %129 = arith.truncf %128 : vector<2x192xf32> to vector<2x192xbf16>
    %c0_188 = arith.constant 0 : index
    %c0_189 = arith.constant 0 : index
    %130 = vector.load %arg2[%c0_188, %c0_189] : memref<192x56xbf16, #tpu.memory_space<vmem>>, vector<192x56xbf16>
    %cst_190 = arith.constant dense<0.000000e+00> : vector<2x56xf32>
    %131 = tpu.matmul %129, %130, %cst_190 {dimension_numbers = #tpu.dot_dimension_numbers<[1], [0], [0], [1], [0, 0, 1, 1], [], []>} : vector<2x192xbf16>, vector<192x56xbf16>, vector<2x56xf32> -> vector<2x56xf32>
    %c0_191 = arith.constant 0 : index
    %c0_192 = arith.constant 0 : index
    %132 = vector.load %arg3[%c0_191, %c0_192] : memref<1x56xf32, #tpu.memory_space<vmem>>, vector<1x56xf32>
    %133 = vector.broadcast %132 : vector<1x56xf32> to vector<2x56xf32>
    %134 = arith.addf %131, %133 : vector<2x56xf32>
    %cst_193 = arith.constant 0.000000e+00 : f32
    %135 = vector.broadcast %cst_193 : f32 to vector<2x56xf32>
    %136 = arith.maximumf %134, %135 : vector<2x56xf32>
    %137 = arith.truncf %136 : vector<2x56xf32> to vector<2x56xbf16>
    %c0_194 = arith.constant 0 : index
    %c0_195 = arith.constant 0 : index
    %c11 = arith.constant 11 : index
    %c0_196 = arith.constant 0 : index
    %138 = vector.load %arg1[%c0_194, %c0_195, %c11, %c0_196] : memref<2x4x16x16xf32, #tpu.memory_space<vmem>>, vector<2x1x1x16xf32>
    %139 = vector.shape_cast %138 : vector<2x1x1x16xf32> to vector<2x16xf32>
    %c0_197 = arith.constant 0 : index
    %c0_198 = arith.constant 0 : index
    %c12 = arith.constant 12 : index
    %c0_199 = arith.constant 0 : index
    %140 = vector.load %arg1[%c0_197, %c0_198, %c12, %c0_199] : memref<2x4x16x16xf32, #tpu.memory_space<vmem>>, vector<2x1x1x16xf32>
    %141 = vector.shape_cast %140 : vector<2x1x1x16xf32> to vector<2x16xf32>
    %c0_200 = arith.constant 0 : index
    %c1_201 = arith.constant 1 : index
    %c11_202 = arith.constant 11 : index
    %c0_203 = arith.constant 0 : index
    %142 = vector.load %arg1[%c0_200, %c1_201, %c11_202, %c0_203] : memref<2x4x16x16xf32, #tpu.memory_space<vmem>>, vector<2x1x1x16xf32>
    %143 = vector.shape_cast %142 : vector<2x1x1x16xf32> to vector<2x16xf32>
    %c0_204 = arith.constant 0 : index
    %c1_205 = arith.constant 1 : index
    %c12_206 = arith.constant 12 : index
    %c0_207 = arith.constant 0 : index
    %144 = vector.load %arg1[%c0_204, %c1_205, %c12_206, %c0_207] : memref<2x4x16x16xf32, #tpu.memory_space<vmem>>, vector<2x1x1x16xf32>
    %145 = vector.shape_cast %144 : vector<2x1x1x16xf32> to vector<2x16xf32>
    %c0_208 = arith.constant 0 : index
    %c2_209 = arith.constant 2 : index
    %c11_210 = arith.constant 11 : index
    %c0_211 = arith.constant 0 : index
    %146 = vector.load %arg1[%c0_208, %c2_209, %c11_210, %c0_211] : memref<2x4x16x16xf32, #tpu.memory_space<vmem>>, vector<2x1x1x16xf32>
    %147 = vector.shape_cast %146 : vector<2x1x1x16xf32> to vector<2x16xf32>
    %c0_212 = arith.constant 0 : index
    %c2_213 = arith.constant 2 : index
    %c12_214 = arith.constant 12 : index
    %c0_215 = arith.constant 0 : index
    %148 = vector.load %arg1[%c0_212, %c2_213, %c12_214, %c0_215] : memref<2x4x16x16xf32, #tpu.memory_space<vmem>>, vector<2x1x1x16xf32>
    %149 = vector.shape_cast %148 : vector<2x1x1x16xf32> to vector<2x16xf32>
    %c0_216 = arith.constant 0 : index
    %c3_217 = arith.constant 3 : index
    %c11_218 = arith.constant 11 : index
    %c0_219 = arith.constant 0 : index
    %150 = vector.load %arg1[%c0_216, %c3_217, %c11_218, %c0_219] : memref<2x4x16x16xf32, #tpu.memory_space<vmem>>, vector<2x1x1x16xf32>
    %151 = vector.shape_cast %150 : vector<2x1x1x16xf32> to vector<2x16xf32>
    %c0_220 = arith.constant 0 : index
    %c3_221 = arith.constant 3 : index
    %c12_222 = arith.constant 12 : index
    %c0_223 = arith.constant 0 : index
    %152 = vector.load %arg1[%c0_220, %c3_221, %c12_222, %c0_223] : memref<2x4x16x16xf32, #tpu.memory_space<vmem>>, vector<2x1x1x16xf32>
    %153 = vector.shape_cast %152 : vector<2x1x1x16xf32> to vector<2x16xf32>
    %154 = tpu.concatenate %115, %139, %141, %119, %143, %145, %123, %147, %149, %127, %151, %153 in 1 : vector<2x16xf32>, vector<2x16xf32>, vector<2x16xf32>, vector<2x16xf32>, vector<2x16xf32>, vector<2x16xf32>, vector<2x16xf32>, vector<2x16xf32>, vector<2x16xf32>, vector<2x16xf32>, vector<2x16xf32>, vector<2x16xf32> -> vector<2x192xf32>
    %155 = arith.truncf %154 : vector<2x192xf32> to vector<2x192xbf16>
    %c0_224 = arith.constant 0 : index
    %c0_225 = arith.constant 0 : index
    %156 = vector.load %arg2[%c0_224, %c0_225] : memref<192x56xbf16, #tpu.memory_space<vmem>>, vector<192x56xbf16>
    %cst_226 = arith.constant dense<0.000000e+00> : vector<2x56xf32>
    %157 = tpu.matmul %155, %156, %cst_226 {dimension_numbers = #tpu.dot_dimension_numbers<[1], [0], [0], [1], [0, 0, 1, 1], [], []>} : vector<2x192xbf16>, vector<192x56xbf16>, vector<2x56xf32> -> vector<2x56xf32>
    %c0_227 = arith.constant 0 : index
    %c0_228 = arith.constant 0 : index
    %158 = vector.load %arg3[%c0_227, %c0_228] : memref<1x56xf32, #tpu.memory_space<vmem>>, vector<1x56xf32>
    %159 = vector.broadcast %158 : vector<1x56xf32> to vector<2x56xf32>
    %160 = arith.addf %157, %159 : vector<2x56xf32>
    %cst_229 = arith.constant 0.000000e+00 : f32
    %161 = vector.broadcast %cst_229 : f32 to vector<2x56xf32>
    %162 = arith.maximumf %160, %161 : vector<2x56xf32>
    %163 = arith.truncf %162 : vector<2x56xf32> to vector<2x56xbf16>
    %c0_230 = arith.constant 0 : index
    %c0_231 = arith.constant 0 : index
    %c13 = arith.constant 13 : index
    %c0_232 = arith.constant 0 : index
    %164 = vector.load %arg1[%c0_230, %c0_231, %c13, %c0_232] : memref<2x4x16x16xf32, #tpu.memory_space<vmem>>, vector<2x1x1x16xf32>
    %165 = vector.shape_cast %164 : vector<2x1x1x16xf32> to vector<2x16xf32>
    %c0_233 = arith.constant 0 : index
    %c0_234 = arith.constant 0 : index
    %c14 = arith.constant 14 : index
    %c0_235 = arith.constant 0 : index
    %166 = vector.load %arg1[%c0_233, %c0_234, %c14, %c0_235] : memref<2x4x16x16xf32, #tpu.memory_space<vmem>>, vector<2x1x1x16xf32>
    %167 = vector.shape_cast %166 : vector<2x1x1x16xf32> to vector<2x16xf32>
    %c0_236 = arith.constant 0 : index
    %c1_237 = arith.constant 1 : index
    %c13_238 = arith.constant 13 : index
    %c0_239 = arith.constant 0 : index
    %168 = vector.load %arg1[%c0_236, %c1_237, %c13_238, %c0_239] : memref<2x4x16x16xf32, #tpu.memory_space<vmem>>, vector<2x1x1x16xf32>
    %169 = vector.shape_cast %168 : vector<2x1x1x16xf32> to vector<2x16xf32>
    %c0_240 = arith.constant 0 : index
    %c1_241 = arith.constant 1 : index
    %c14_242 = arith.constant 14 : index
    %c0_243 = arith.constant 0 : index
    %170 = vector.load %arg1[%c0_240, %c1_241, %c14_242, %c0_243] : memref<2x4x16x16xf32, #tpu.memory_space<vmem>>, vector<2x1x1x16xf32>
    %171 = vector.shape_cast %170 : vector<2x1x1x16xf32> to vector<2x16xf32>
    %c0_244 = arith.constant 0 : index
    %c2_245 = arith.constant 2 : index
    %c13_246 = arith.constant 13 : index
    %c0_247 = arith.constant 0 : index
    %172 = vector.load %arg1[%c0_244, %c2_245, %c13_246, %c0_247] : memref<2x4x16x16xf32, #tpu.memory_space<vmem>>, vector<2x1x1x16xf32>
    %173 = vector.shape_cast %172 : vector<2x1x1x16xf32> to vector<2x16xf32>
    %c0_248 = arith.constant 0 : index
    %c2_249 = arith.constant 2 : index
    %c14_250 = arith.constant 14 : index
    %c0_251 = arith.constant 0 : index
    %174 = vector.load %arg1[%c0_248, %c2_249, %c14_250, %c0_251] : memref<2x4x16x16xf32, #tpu.memory_space<vmem>>, vector<2x1x1x16xf32>
    %175 = vector.shape_cast %174 : vector<2x1x1x16xf32> to vector<2x16xf32>
    %c0_252 = arith.constant 0 : index
    %c3_253 = arith.constant 3 : index
    %c13_254 = arith.constant 13 : index
    %c0_255 = arith.constant 0 : index
    %176 = vector.load %arg1[%c0_252, %c3_253, %c13_254, %c0_255] : memref<2x4x16x16xf32, #tpu.memory_space<vmem>>, vector<2x1x1x16xf32>
    %177 = vector.shape_cast %176 : vector<2x1x1x16xf32> to vector<2x16xf32>
    %c0_256 = arith.constant 0 : index
    %c3_257 = arith.constant 3 : index
    %c14_258 = arith.constant 14 : index
    %c0_259 = arith.constant 0 : index
    %178 = vector.load %arg1[%c0_256, %c3_257, %c14_258, %c0_259] : memref<2x4x16x16xf32, #tpu.memory_space<vmem>>, vector<2x1x1x16xf32>
    %179 = vector.shape_cast %178 : vector<2x1x1x16xf32> to vector<2x16xf32>
    %180 = tpu.concatenate %141, %165, %167, %145, %169, %171, %149, %173, %175, %153, %177, %179 in 1 : vector<2x16xf32>, vector<2x16xf32>, vector<2x16xf32>, vector<2x16xf32>, vector<2x16xf32>, vector<2x16xf32>, vector<2x16xf32>, vector<2x16xf32>, vector<2x16xf32>, vector<2x16xf32>, vector<2x16xf32>, vector<2x16xf32> -> vector<2x192xf32>
    %181 = arith.truncf %180 : vector<2x192xf32> to vector<2x192xbf16>
    %c0_260 = arith.constant 0 : index
    %c0_261 = arith.constant 0 : index
    %182 = vector.load %arg2[%c0_260, %c0_261] : memref<192x56xbf16, #tpu.memory_space<vmem>>, vector<192x56xbf16>
    %cst_262 = arith.constant dense<0.000000e+00> : vector<2x56xf32>
    %183 = tpu.matmul %181, %182, %cst_262 {dimension_numbers = #tpu.dot_dimension_numbers<[1], [0], [0], [1], [0, 0, 1, 1], [], []>} : vector<2x192xbf16>, vector<192x56xbf16>, vector<2x56xf32> -> vector<2x56xf32>
    %c0_263 = arith.constant 0 : index
    %c0_264 = arith.constant 0 : index
    %184 = vector.load %arg3[%c0_263, %c0_264] : memref<1x56xf32, #tpu.memory_space<vmem>>, vector<1x56xf32>
    %185 = vector.broadcast %184 : vector<1x56xf32> to vector<2x56xf32>
    %186 = arith.addf %183, %185 : vector<2x56xf32>
    %cst_265 = arith.constant 0.000000e+00 : f32
    %187 = vector.broadcast %cst_265 : f32 to vector<2x56xf32>
    %188 = arith.maximumf %186, %187 : vector<2x56xf32>
    %189 = arith.truncf %188 : vector<2x56xf32> to vector<2x56xbf16>
    %190 = tpu.concatenate %33, %59, %85 in 1 : vector<2x56xbf16>, vector<2x56xbf16>, vector<2x56xbf16> -> vector<2x168xbf16>
    %c0_266 = arith.constant 0 : index
    %c0_267 = arith.constant 0 : index
    %191 = vector.load %arg4[%c0_266, %c0_267] : memref<168x48xbf16, #tpu.memory_space<vmem>>, vector<168x48xbf16>
    %cst_268 = arith.constant dense<0.000000e+00> : vector<2x48xf32>
    %192 = tpu.matmul %190, %191, %cst_268 {dimension_numbers = #tpu.dot_dimension_numbers<[1], [0], [0], [1], [0, 0, 1, 1], [], []>} : vector<2x168xbf16>, vector<168x48xbf16>, vector<2x48xf32> -> vector<2x48xf32>
    %c0_269 = arith.constant 0 : index
    %c0_270 = arith.constant 0 : index
    %193 = vector.load %arg5[%c0_269, %c0_270] : memref<1x48xf32, #tpu.memory_space<vmem>>, vector<1x48xf32>
    %194 = vector.broadcast %193 : vector<1x48xf32> to vector<2x48xf32>
    %195 = arith.addf %192, %194 : vector<2x48xf32>
    %cst_271 = arith.constant 0.000000e+00 : f32
    %196 = vector.broadcast %cst_271 : f32 to vector<2x48xf32>
    %197 = arith.maximumf %195, %196 : vector<2x48xf32>
    %198 = arith.truncf %197 : vector<2x48xf32> to vector<2x48xbf16>
    %c0_272 = arith.constant 0 : index
    %c0_273 = arith.constant 0 : index
    %199 = vector.load %arg6[%c0_272, %c0_273] : memref<144x32xbf16, #tpu.memory_space<vmem>>, vector<48x32xbf16>
    %cst_274 = arith.constant dense<0.000000e+00> : vector<2x32xf32>
    %200 = tpu.matmul %198, %199, %cst_274 {dimension_numbers = #tpu.dot_dimension_numbers<[1], [0], [0], [1], [0, 0, 1, 1], [], []>} : vector<2x48xbf16>, vector<48x32xbf16>, vector<2x32xf32> -> vector<2x32xf32>
    %201 = tpu.concatenate %85, %111, %137 in 1 : vector<2x56xbf16>, vector<2x56xbf16>, vector<2x56xbf16> -> vector<2x168xbf16>
    %c0_275 = arith.constant 0 : index
    %c0_276 = arith.constant 0 : index
    %202 = vector.load %arg4[%c0_275, %c0_276] : memref<168x48xbf16, #tpu.memory_space<vmem>>, vector<168x48xbf16>
    %cst_277 = arith.constant dense<0.000000e+00> : vector<2x48xf32>
    %203 = tpu.matmul %201, %202, %cst_277 {dimension_numbers = #tpu.dot_dimension_numbers<[1], [0], [0], [1], [0, 0, 1, 1], [], []>} : vector<2x168xbf16>, vector<168x48xbf16>, vector<2x48xf32> -> vector<2x48xf32>
    %c0_278 = arith.constant 0 : index
    %c0_279 = arith.constant 0 : index
    %204 = vector.load %arg5[%c0_278, %c0_279] : memref<1x48xf32, #tpu.memory_space<vmem>>, vector<1x48xf32>
    %205 = vector.broadcast %204 : vector<1x48xf32> to vector<2x48xf32>
    %206 = arith.addf %203, %205 : vector<2x48xf32>
    %cst_280 = arith.constant 0.000000e+00 : f32
    %207 = vector.broadcast %cst_280 : f32 to vector<2x48xf32>
    %208 = arith.maximumf %206, %207 : vector<2x48xf32>
    %209 = arith.truncf %208 : vector<2x48xf32> to vector<2x48xbf16>
    %c48 = arith.constant 48 : index
    %c0_281 = arith.constant 0 : index
    %210 = vector.load %arg6[%c48, %c0_281] : memref<144x32xbf16, #tpu.memory_space<vmem>>, vector<48x32xbf16>
    %cst_282 = arith.constant dense<0.000000e+00> : vector<2x32xf32>
    %211 = tpu.matmul %209, %210, %cst_282 {dimension_numbers = #tpu.dot_dimension_numbers<[1], [0], [0], [1], [0, 0, 1, 1], [], []>} : vector<2x48xbf16>, vector<48x32xbf16>, vector<2x32xf32> -> vector<2x32xf32>
    %212 = arith.addf %200, %211 : vector<2x32xf32>
    %213 = tpu.concatenate %137, %163, %189 in 1 : vector<2x56xbf16>, vector<2x56xbf16>, vector<2x56xbf16> -> vector<2x168xbf16>
    %c0_283 = arith.constant 0 : index
    %c0_284 = arith.constant 0 : index
    %214 = vector.load %arg4[%c0_283, %c0_284] : memref<168x48xbf16, #tpu.memory_space<vmem>>, vector<168x48xbf16>
    %cst_285 = arith.constant dense<0.000000e+00> : vector<2x48xf32>
    %215 = tpu.matmul %213, %214, %cst_285 {dimension_numbers = #tpu.dot_dimension_numbers<[1], [0], [0], [1], [0, 0, 1, 1], [], []>} : vector<2x168xbf16>, vector<168x48xbf16>, vector<2x48xf32> -> vector<2x48xf32>
    %c0_286 = arith.constant 0 : index
    %c0_287 = arith.constant 0 : index
    %216 = vector.load %arg5[%c0_286, %c0_287] : memref<1x48xf32, #tpu.memory_space<vmem>>, vector<1x48xf32>
    %217 = vector.broadcast %216 : vector<1x48xf32> to vector<2x48xf32>
    %218 = arith.addf %215, %217 : vector<2x48xf32>
    %cst_288 = arith.constant 0.000000e+00 : f32
    %219 = vector.broadcast %cst_288 : f32 to vector<2x48xf32>
    %220 = arith.maximumf %218, %219 : vector<2x48xf32>
    %221 = arith.truncf %220 : vector<2x48xf32> to vector<2x48xbf16>
    %c96 = arith.constant 96 : index
    %c0_289 = arith.constant 0 : index
    %222 = vector.load %arg6[%c96, %c0_289] : memref<144x32xbf16, #tpu.memory_space<vmem>>, vector<48x32xbf16>
    %cst_290 = arith.constant dense<0.000000e+00> : vector<2x32xf32>
    %223 = tpu.matmul %221, %222, %cst_290 {dimension_numbers = #tpu.dot_dimension_numbers<[1], [0], [0], [1], [0, 0, 1, 1], [], []>} : vector<2x48xbf16>, vector<48x32xbf16>, vector<2x32xf32> -> vector<2x32xf32>
    %224 = arith.addf %212, %223 : vector<2x32xf32>
    %c0_291 = arith.constant 0 : index
    %c0_292 = arith.constant 0 : index
    %225 = vector.load %arg7[%c0_291, %c0_292] : memref<1x32xf32, #tpu.memory_space<vmem>>, vector<1x32xf32>
    %226 = vector.broadcast %225 : vector<1x32xf32> to vector<2x32xf32>
    %227 = arith.addf %224, %226 : vector<2x32xf32>
    %cst_293 = arith.constant 0.000000e+00 : f32
    %228 = vector.broadcast %cst_293 : f32 to vector<2x32xf32>
    %229 = arith.maximumf %227, %228 : vector<2x32xf32>
    %230 = arith.truncf %229 : vector<2x32xf32> to vector<2x32xbf16>
    %c0_294 = arith.constant 0 : index
    %c0_295 = arith.constant 0 : index
    %231 = vector.load %arg8[%c0_294, %c0_295] : memref<32x32xbf16, #tpu.memory_space<vmem>>, vector<32x32xbf16>
    %cst_296 = arith.constant dense<0.000000e+00> : vector<2x32xf32>
    %232 = tpu.matmul %230, %231, %cst_296 {dimension_numbers = #tpu.dot_dimension_numbers<[1], [0], [0], [1], [0, 0, 1, 1], [], []>} : vector<2x32xbf16>, vector<32x32xbf16>, vector<2x32xf32> -> vector<2x32xf32>
    %c0_297 = arith.constant 0 : index
    %c0_298 = arith.constant 0 : index
    %233 = vector.load %arg9[%c0_297, %c0_298] : memref<1x32xf32, #tpu.memory_space<vmem>>, vector<1x32xf32>
    %234 = vector.broadcast %233 : vector<1x32xf32> to vector<2x32xf32>
    %235 = arith.addf %232, %234 : vector<2x32xf32>
    %cst_299 = arith.constant 0.000000e+00 : f32
    %236 = vector.broadcast %cst_299 : f32 to vector<2x32xf32>
    %237 = arith.maximumf %235, %236 : vector<2x32xf32>
    %238 = arith.truncf %237 : vector<2x32xf32> to vector<2x32xbf16>
    %c0_300 = arith.constant 0 : index
    %c0_301 = arith.constant 0 : index
    %239 = vector.load %arg10[%c0_300, %c0_301] : memref<32x6xbf16, #tpu.memory_space<vmem>>, vector<32x6xbf16>
    %cst_302 = arith.constant dense<0.000000e+00> : vector<2x6xf32>
    %240 = tpu.matmul %238, %239, %cst_302 {dimension_numbers = #tpu.dot_dimension_numbers<[1], [0], [0], [1], [0, 0, 1, 1], [], []>} : vector<2x32xbf16>, vector<32x6xbf16>, vector<2x6xf32> -> vector<2x6xf32>
    %c0_303 = arith.constant 0 : index
    %c0_304 = arith.constant 0 : index
    %241 = vector.load %arg11[%c0_303, %c0_304] : memref<1x6xf32, #tpu.memory_space<vmem>>, vector<1x6xf32>
    %242 = vector.broadcast %241 : vector<1x6xf32> to vector<2x6xf32>
    %243 = arith.addf %240, %242 : vector<2x6xf32>
    %c0_305 = arith.constant 0 : index
    %c0_306 = arith.constant 0 : index
    %244 = vector.load %arg12[%c0_305, %c0_306] : memref<2x6xf32, #tpu.memory_space<vmem>>, vector<2x6xf32>
    tpu.vector_store %arg12[%c0_305, %c0_306], %243 {strides = array<i32>} : memref<2x6xf32, #tpu.memory_space<vmem>>, vector<2x6xf32>,
    return
  }
  func.func @transform_0(%arg0: i32) -> (i32, i32, i32, i32) {
    %c0_i32 = arith.constant 0 : i32
    %c0_i32_0 = arith.constant 0 : i32
    %c0_i32_1 = arith.constant 0 : i32
    %c0_i32_2 = arith.constant 0 : i32
    return %arg0, %c0_i32, %c0_i32_0, %c0_i32_1 : i32, i32, i32, i32
  }
  func.func @transform_1(%arg0: i32) -> (i32, i32) {
    %c0_i32 = arith.constant 0 : i32
    %c0_i32_0 = arith.constant 0 : i32
    %c0_i32_1 = arith.constant 0 : i32
    return %c0_i32, %c0_i32_0 : i32, i32
  }
  func.func @transform_2(%arg0: i32) -> (i32, i32) {
    %c0_i32 = arith.constant 0 : i32
    %c0_i32_0 = arith.constant 0 : i32
    %c0_i32_1 = arith.constant 0 : i32
    return %c0_i32, %c0_i32_0 : i32, i32
  }
  func.func @transform_3(%arg0: i32) -> (i32, i32) {
    %c0_i32 = arith.constant 0 : i32
    %c0_i32_0 = arith.constant 0 : i32
    %c0_i32_1 = arith.constant 0 : i32
    return %c0_i32, %c0_i32_0 : i32, i32
  }
  func.func @transform_4(%arg0: i32) -> (i32, i32) {
    %c0_i32 = arith.constant 0 : i32
    %c0_i32_0 = arith.constant 0 : i32
    %c0_i32_1 = arith.constant 0 : i32
    return %c0_i32, %c0_i32_0 : i32, i32
  }
  func.func @transform_5(%arg0: i32) -> (i32, i32) {
    %c0_i32 = arith.constant 0 : i32
    %c0_i32_0 = arith.constant 0 : i32
    %c0_i32_1 = arith.constant 0 : i32
    return %c0_i32, %c0_i32_0 : i32, i32
  }
  func.func @transform_6(%arg0: i32) -> (i32, i32) {
    %c0_i32 = arith.constant 0 : i32
    %c0_i32_0 = arith.constant 0 : i32
    %c0_i32_1 = arith.constant 0 : i32
    return %c0_i32, %c0_i32_0 : i32, i32
  }
  func.func @transform_7(%arg0: i32) -> (i32, i32) {
    %c0_i32 = arith.constant 0 : i32
    %c0_i32_0 = arith.constant 0 : i32
    %c0_i32_1 = arith.constant 0 : i32
    return %c0_i32, %c0_i32_0 : i32, i32
  }
  func.func @transform_8(%arg0: i32) -> (i32, i32) {
    %c0_i32 = arith.constant 0 : i32
    %c0_i32_0 = arith.constant 0 : i32
    %c0_i32_1 = arith.constant 0 : i32
    return %c0_i32, %c0_i32_0 : i32, i32
  }
  func.func @transform_9(%arg0: i32) -> (i32, i32) {
    %c0_i32 = arith.constant 0 : i32
    %c0_i32_0 = arith.constant 0 : i32
    %c0_i32_1 = arith.constant 0 : i32
    return %c0_i32, %c0_i32_0 : i32, i32
  }
  func.func @transform_10(%arg0: i32) -> (i32, i32) {
    %c0_i32 = arith.constant 0 : i32
    %c0_i32_0 = arith.constant 0 : i32
    %c0_i32_1 = arith.constant 0 : i32
    return %c0_i32, %c0_i32_0 : i32, i32
  }
  func.func @transform_11(%arg0: i32) -> (i32, i32) {
    %c0_i32 = arith.constant 0 : i32
    %c0_i32_0 = arith.constant 0 : i32
    return %arg0, %c0_i32 : i32, i32
  }
}

</mosaic_0001>

<llo_original>
// kernel: tpu_custom_call.1
$region0: #{tpu_custom_call.1}
  #allocation0 [shape = 'u32[]', space=smem, size = 0x4, offset = 0x4, fixed_abs, tag = 'smem constant byte address 0x4 - core index']
  #allocation1 [shape = 'u32[72,128]{1,0:T(1,128)}', space=vmem, size = 0x9000, scoped, tag = 'internal scratch']
  %s0 = inlined_call_operand.vmem [shape: f32[2,4,16,16], index: 0, kind: input, shape index: {}]
  %s1 = inlined_call_operand.vmem [shape: bf16[192,56], index: 1, kind: input, shape index: {}]
  %s2 = inlined_call_operand.vmem [shape: f32[1,56], index: 2, kind: input, shape index: {}]
  %s3 = inlined_call_operand.vmem [shape: bf16[168,48], index: 3, kind: input, shape index: {}]
  %s4 = inlined_call_operand.vmem [shape: f32[1,48], index: 4, kind: input, shape index: {}]
  %s5 = inlined_call_operand.vmem [shape: bf16[144,32], index: 5, kind: input, shape index: {}]
  %s6 = inlined_call_operand.vmem [shape: f32[1,32], index: 6, kind: input, shape index: {}]
  %s7 = inlined_call_operand.vmem [shape: bf16[32,32], index: 7, kind: input, shape index: {}]
  %s8 = inlined_call_operand.vmem [shape: f32[1,32], index: 8, kind: input, shape index: {}]
  %s9 = inlined_call_operand.vmem [shape: bf16[32,6], index: 9, kind: input, shape index: {}]
  %s10 = inlined_call_operand.vmem [shape: f32[1,6], index: 10, kind: input, shape index: {}]
  %s11 = inlined_call_operand.hbm [shape: f32[2,6], index: 11, kind: output, shape index: {}]
  %s12 = sld [smem:[#allocation0]]
  $region54: #{tpu_custom_call.1} parent=0
    _
  %s14 = ssub.s32 1, %s12
  %s15 = scalar_select 0, %s14, %s12
  $region1: #{tpu_custom_call.1} parent=0
    #allocation2 [shape = 'u8[1024]{0}', space=vmem, size = 0x400, scoped, tag = 'output window, operand 0, single buffered']
    #allocation3 [shape = 's32[1]{0}', space=sflag, size = 0x4, scoped, tag = 'scoped memory for tpu_custom_call.1']
    %16 = vsyncpa [#allocation3], 0
    // Predicated region
    $region2: #{tpu_custom_call.1} parent=1 // pred_check
      _
    $region3: #{tpu_custom_call.1} parent=1 // pred_check_branch
      %18 = sbr.rel (0) target = $region5
    $region4: #{tpu_custom_call.1} parent=1 // pred_region
      _
    $region5: #{tpu_custom_call.1} parent=1 // pred_fallthru
      _
    // Predicated region
    $region6: #{tpu_custom_call.1} parent=1 // pred_check
      _
    $region7: #{tpu_custom_call.1} parent=1 // pred_check_branch
      %20 = sbr.rel (0) target = $region9
    $region8: #{tpu_custom_call.1} parent=1 // pred_region
      _
    $region9: #{tpu_custom_call.1} parent=1 // pred_fallthru
      _
    // Predicated region
    $region10: #{tpu_custom_call.1} parent=1 // pred_check
      _
    $region11: #{tpu_custom_call.1} parent=1 // pred_check_branch
      %22 = sbr.rel (0) target = $region13
    $region12: #{tpu_custom_call.1} parent=1 // pred_region
      _
    $region13: #{tpu_custom_call.1} parent=1 // pred_fallthru
      _
    // Predicated region
    $region14: #{tpu_custom_call.1} parent=1 // pred_check
      _
    $region15: #{tpu_custom_call.1} parent=1 // pred_check_branch
      %24 = sbr.rel (0) target = $region17
    $region16: #{tpu_custom_call.1} parent=1 // pred_region
      _
    $region17: #{tpu_custom_call.1} parent=1 // pred_fallthru
      _
    // Predicated region
    $region18: #{tpu_custom_call.1} parent=1 // pred_check
      _
    $region19: #{tpu_custom_call.1} parent=1 // pred_check_branch
      %26 = sbr.rel (0) target = $region21
    $region20: #{tpu_custom_call.1} parent=1 // pred_region
      _
    $region21: #{tpu_custom_call.1} parent=1 // pred_fallthru
      _
    // Predicated region
    $region22: #{tpu_custom_call.1} parent=1 // pred_check
      _
    $region23: #{tpu_custom_call.1} parent=1 // pred_check_branch
      %28 = sbr.rel (0) target = $region25
    $region24: #{tpu_custom_call.1} parent=1 // pred_region
      _
    $region25: #{tpu_custom_call.1} parent=1 // pred_fallthru
      _
    // Predicated region
    $region26: #{tpu_custom_call.1} parent=1 // pred_check
      _
    $region27: #{tpu_custom_call.1} parent=1 // pred_check_branch
      %30 = sbr.rel (0) target = $region29
    $region28: #{tpu_custom_call.1} parent=1 // pred_region
      _
    $region29: #{tpu_custom_call.1} parent=1 // pred_fallthru
      _
    // Predicated region
    $region30: #{tpu_custom_call.1} parent=1 // pred_check
      _
    $region31: #{tpu_custom_call.1} parent=1 // pred_check_branch
      %32 = sbr.rel (0) target = $region33
    $region32: #{tpu_custom_call.1} parent=1 // pred_region
      _
    $region33: #{tpu_custom_call.1} parent=1 // pred_fallthru
      _
    // Predicated region
    $region34: #{tpu_custom_call.1} parent=1 // pred_check
      _
    $region35: #{tpu_custom_call.1} parent=1 // pred_check_branch
      %34 = sbr.rel (0) target = $region37
    $region36: #{tpu_custom_call.1} parent=1 // pred_region
      _
    $region37: #{tpu_custom_call.1} parent=1 // pred_fallthru
      _
    // Predicated region
    $region38: #{tpu_custom_call.1} parent=1 // pred_check
      _
    $region39: #{tpu_custom_call.1} parent=1 // pred_check_branch
      %36 = sbr.rel (0) target = $region41
    $region40: #{tpu_custom_call.1} parent=1 // pred_region
      _
    $region41: #{tpu_custom_call.1} parent=1 // pred_fallthru
      _
    // Predicated region
    $region42: #{tpu_custom_call.1} parent=1 // pred_check
      _
    $region43: #{tpu_custom_call.1} parent=1 // pred_check_branch
      %38 = sbr.rel (0) target = $region45
    $region44: #{tpu_custom_call.1} parent=1 // pred_region
      _
    $region45: #{tpu_custom_call.1} parent=1 // pred_fallthru
      _
    %v40 = vld [vmem:[%s0] sm:$0x1]
    %v41 = vld [vmem:[%s0 + $0x40] sm:$0x1]
    %v42 = vld [vmem:[%s0 + $0x1] sm:$0x1]
    %v43 = vld [vmem:[%s0 + $0x41] sm:$0x1]
    %v44 = vld [vmem:[%s0 + $0x2] sm:$0x1]
    %v45 = vld [vmem:[%s0 + $0x42] sm:$0x1]
    %s46 = scalar_lea.vmem %s0, 16
    %v47 = vld [vmem:[%s46] sm:$0x1]
    %v48 = vld [vmem:[%s46 + $0x40] sm:$0x1]
    %v49 = vld [vmem:[%s46 + $0x1] sm:$0x1]
    %v50 = vld [vmem:[%s46 + $0x41] sm:$0x1]
    %v51 = vld [vmem:[%s46 + $0x2] sm:$0x1]
    %v52 = vld [vmem:[%s46 + $0x42] sm:$0x1]
    %s53 = scalar_lea.vmem %s0, 32
    %v54 = vld [vmem:[%s53] sm:$0x1]
    %v55 = vld [vmem:[%s53 + $0x40] sm:$0x1]
    %v56 = vld [vmem:[%s53 + $0x1] sm:$0x1]
    %v57 = vld [vmem:[%s53 + $0x41] sm:$0x1]
    %v58 = vld [vmem:[%s53 + $0x2] sm:$0x1]
    %v59 = vld [vmem:[%s53 + $0x42] sm:$0x1]
    %s60 = scalar_lea.vmem %s0, 48
    %v61 = vld [vmem:[%s60] sm:$0x1]
    %v62 = vld [vmem:[%s60 + $0x40] sm:$0x1]
    %v63 = vld [vmem:[%s60 + $0x1] sm:$0x1]
    %v64 = vld [vmem:[%s60 + $0x41] sm:$0x1]
    %v65 = vld [vmem:[%s60 + $0x2] sm:$0x1]
    %v66 = vld [vmem:[%s60 + $0x42] sm:$0x1]
    %v69 = vrot.slane %v41, 7
    %vm70 = vcmask 1041409
    %v71 = vsel %vm70, %v69, %v40
    %v75 = vrot.slane %v43, 7
    %v76 = vsel %vm70, %v75, %v42
    %77 = vrot.lane.b32.xlu0 %v76, 16
    %v78 = vpop.permute.xlu0 %77
    %v82 = vrot.slane %v45, 7
    %v83 = vsel %vm70, %v82, %v44
    %84 = vrot.lane.b32.xlu0 %v83, 32
    %v85 = vpop.permute.xlu0 %84
    %v89 = vrot.slane %v48, 7
    %v90 = vsel %vm70, %v89, %v47
    %91 = vrot.lane.b32.xlu0 %v90, 48
    %v92 = vpop.permute.xlu0 %91
    %v96 = vrot.slane %v50, 7
    %v97 = vsel %vm70, %v96, %v49
    %98 = vrot.lane.b32.xlu0 %v97, 64
    %v99 = vpop.permute.xlu0 %98
    %v103 = vrot.slane %v52, 7
    %v104 = vsel %vm70, %v103, %v51
    %105 = vrot.lane.b32.xlu0 %v104, 80
    %v106 = vpop.permute.xlu0 %105
    %v110 = vrot.slane %v55, 7
    %v111 = vsel %vm70, %v110, %v54
    %112 = vrot.lane.b32.xlu0 %v111, 96
    %v113 = vpop.permute.xlu0 %112
    %v117 = vrot.slane %v57, 7
    %v118 = vsel %vm70, %v117, %v56
    %119 = vrot.lane.b32.xlu0 %v118, 112
    %v120 = vpop.permute.xlu0 %119
    %v124 = vrot.slane %v59, 7
    %v125 = vsel %vm70, %v124, %v58
    %v129 = vrot.slane %v62, 7
    %v130 = vsel %vm70, %v129, %v61
    %131 = vrot.lane.b32.xlu0 %v130, 16
    %v132 = vpop.permute.xlu0 %131
    %v136 = vrot.slane %v64, 7
    %v137 = vsel %vm70, %v136, %v63
    %138 = vrot.lane.b32.xlu0 %v137, 32
    %v139 = vpop.permute.xlu0 %138
    %v143 = vrot.slane %v66, 7
    %v144 = vsel %vm70, %v143, %v65
    %145 = vrot.lane.b32.xlu0 %v144, 48
    %v146 = vpop.permute.xlu0 %145
    %vm148 = vcmask 130048
    %v149 = vsel %vm148, %v71, %v78
    %vm150 = vcmask 261120
    %v151 = vsel %vm150, %v149, %v85
    %vm152 = vcmask 392192
    %v153 = vsel %vm152, %v151, %v92
    %vm154 = vcmask 523264
    %v155 = vsel %vm154, %v153, %v99
    %vm156 = vcmask 654336
    %v157 = vsel %vm156, %v155, %v106
    %vm158 = vcmask 785408
    %v159 = vsel %vm158, %v157, %v113
    %vm160 = vcmask 916480
    %v161 = vsel %vm160, %v159, %v120
    %v162 = vsel %vm148, %v125, %v132
    %v163 = vsel %vm150, %v162, %v139
    %v164 = vsel %vm152, %v163, %v146
    %v165 = vpack.c.bf16 %v161, %v161
    %v166 = vpack.c.bf16 %v164, %v164
    %v167 = vld [vmem:[%s1] sm:$0xf]
    %v168 = vld [vmem:[%s1 + $0x4] sm:$0xf]
    %v169 = vld [vmem:[%s1 + $0x8] sm:$0xf]
    %v170 = vld [vmem:[%s1 + $0xc] sm:$0xf]
    %v171 = vld [vmem:[%s1 + $0x10] sm:$0xf]
    %v172 = vld [vmem:[%s1 + $0x14] sm:$0xf]
    %v173 = vld [vmem:[%s1 + $0x18] sm:$0xf]
    %v174 = vld [vmem:[%s1 + $0x1c] sm:$0xf]
    %v175 = vld [vmem:[%s1 + $0x20] sm:$0xf]
    %v176 = vld [vmem:[%s1 + $0x24] sm:$0xf]
    %v177 = vld [vmem:[%s1 + $0x28] sm:$0xf]
    %v178 = vld [vmem:[%s1 + $0x2c] sm:$0xf]
    %v179 = vld [vmem:[%s1 + $0x30] sm:$0xf]
    %v180 = vld [vmem:[%s1 + $0x34] sm:$0xf]
    %v181 = vld [vmem:[%s1 + $0x38] sm:$0xf]
    %v182 = vld [vmem:[%s1 + $0x3c] sm:$0xf]
    %v183 = vld [vmem:[%s1 + $0x40] sm:$0xf]
    %v184 = vld [vmem:[%s1 + $0x44] sm:$0xf]
    %v185 = vld [vmem:[%s1 + $0x48] sm:$0xf]
    %v186 = vld [vmem:[%s1 + $0x4c] sm:$0xf]
    %v187 = vld [vmem:[%s1 + $0x50] sm:$0xf]
    %v188 = vld [vmem:[%s1 + $0x54] sm:$0xf]
    %v189 = vld [vmem:[%s1 + $0x58] sm:$0xf]
    %v190 = vld [vmem:[%s1 + $0x5c] sm:$0xf]
    %v191 = vld [vmem:[%s2] sm:$0x1]
    %v193 = vperm.slane %v191, 0
    %v219 = vunpack.c.l.b16 %v167
    %v220 = vunpack.c.l.b16 %v168
    %v221 = vunpack.c.l.b16 %v169
    %v222 = vunpack.c.l.b16 %v170
    %v223 = vunpack.c.l.b16 %v171
    %v224 = vunpack.c.l.b16 %v172
    %v225 = vunpack.c.l.b16 %v173
    %v226 = vunpack.c.l.b16 %v174
    %v227 = vunpack.c.l.b16 %v175
    %v228 = vunpack.c.l.b16 %v176
    %v229 = vunpack.c.l.b16 %v177
    %v230 = vunpack.c.l.b16 %v178
    %v231 = vunpack.c.l.b16 %v179
    %v232 = vunpack.c.l.b16 %v180
    %v233 = vunpack.c.l.b16 %v181
    %v234 = vunpack.c.l.b16 %v182
    %v235 = vunpack.c.l.b16 %v183
    %v236 = vunpack.c.l.b16 %v184
    %v237 = vunpack.c.l.b16 %v185
    %v238 = vunpack.c.l.b16 %v186
    %v239 = vunpack.c.l.b16 %v187
    %v240 = vunpack.c.l.b16 %v188
    %v241 = vunpack.c.l.b16 %v189
    %v242 = vunpack.c.l.b16 %v190
    %v243 = vpack.c.b16 %v220, %v219
    %v244 = vpack.c.b16 %v222, %v221
    %v245 = vpack.c.b16 %v224, %v223
    %v246 = vpack.c.b16 %v226, %v225
    %v247 = vpack.c.b16 %v228, %v227
    %v248 = vpack.c.b16 %v230, %v229
    %v249 = vpack.c.b16 %v232, %v231
    %v250 = vpack.c.b16 %v234, %v233
    %v251 = vpack.c.b16 %v236, %v235
    %v252 = vpack.c.b16 %v238, %v237
    %v253 = vpack.c.b16 %v240, %v239
    %v254 = vpack.c.b16 %v242, %v241
    %v268 = vsel %vm154, %v166, 0
    %270 = vmatpush.bf16.msra.mxu0 %v250
    %271 = vmatpush.bf16.msra.mxu0 %v249
    %272 = vmatpush.bf16.msra.mxu0 %v248
    %273 = vmatpush.bf16.msra.mxu0 %v247
    %274 = vmatpush.bf16.msra.mxu0 %v246
    %275 = vmatpush.bf16.msra.mxu0 %v245
    %276 = vmatpush.bf16.msra.mxu0 %v244
    %277 = vmatpush.bf16.msra.mxu0 %v243
    %278 = vmatmul.bf16.gmra.mxu0 %v165
    %v279 = vpop.f32.mrf.mxu0
    %v280 = vadd.f32 %v193, %v279
    %v281 = vpop.f32.mrf.mxu0
    %282 = vdwg.mxu0
    %283 = vmatpush.bf16.msra.mxu0 0
    %284 = vmatpush.bf16.msra.mxu0 0
    %285 = vmatpush.bf16.msra.mxu0 0
    %286 = vmatpush.bf16.msra.mxu0 0
    %287 = vmatpush.bf16.msra.mxu0 %v254
    %288 = vmatpush.bf16.msra.mxu0 %v253
    %289 = vmatpush.bf16.msra.mxu0 %v252
    %290 = vmatpush.bf16.msra.mxu0 %v251
    %291 = vmatmul.bf16.gmra.mxu0 %v268
    %v292 = vpop.f32.mrf.mxu0
    %v293 = vadd.f32 %v280, %v292
    %v294 = vpop.f32.mrf.mxu0
    %295 = vdwg.mxu0
    %v296 = vmax.f32 %v293, 0.0
    %v297 = vpack.c.bf16 %v296, %v296
    %v298 = vld [vmem:[%s0 + $0x3] sm:$0x1]
    %v299 = vld [vmem:[%s0 + $0x43] sm:$0x1]
    %v300 = vld [vmem:[%s0 + $0x4] sm:$0x1]
    %v301 = vld [vmem:[%s0 + $0x44] sm:$0x1]
    %v302 = vld [vmem:[%s46 + $0x3] sm:$0x1]
    %v303 = vld [vmem:[%s46 + $0x43] sm:$0x1]
    %v304 = vld [vmem:[%s46 + $0x4] sm:$0x1]
    %v305 = vld [vmem:[%s46 + $0x44] sm:$0x1]
    %v306 = vld [vmem:[%s53 + $0x3] sm:$0x1]
    %v307 = vld [vmem:[%s53 + $0x43] sm:$0x1]
    %v308 = vld [vmem:[%s53 + $0x4] sm:$0x1]
    %v309 = vld [vmem:[%s53 + $0x44] sm:$0x1]
    %v310 = vld [vmem:[%s60 + $0x3] sm:$0x1]
    %v311 = vld [vmem:[%s60 + $0x43] sm:$0x1]
    %v312 = vld [vmem:[%s60 + $0x4] sm:$0x1]
    %v313 = vld [vmem:[%s60 + $0x44] sm:$0x1]
    %v317 = vrot.slane %v299, 7
    %v318 = vsel %vm70, %v317, %v298
    %319 = vrot.lane.b32.xlu0 %v318, 16
    %v320 = vpop.permute.xlu0 %319
    %v324 = vrot.slane %v301, 7
    %v325 = vsel %vm70, %v324, %v300
    %326 = vrot.lane.b32.xlu0 %v325, 32
    %v327 = vpop.permute.xlu0 %326
    %329 = vrot.lane.b32.xlu0 %v104, 48
    %v330 = vpop.permute.xlu0 %329
    %v334 = vrot.slane %v303, 7
    %v335 = vsel %vm70, %v334, %v302
    %336 = vrot.lane.b32.xlu0 %v335, 64
    %v337 = vpop.permute.xlu0 %336
    %v341 = vrot.slane %v305, 7
    %v342 = vsel %vm70, %v341, %v304
    %343 = vrot.lane.b32.xlu0 %v342, 80
    %v344 = vpop.permute.xlu0 %343
    %346 = vrot.lane.b32.xlu0 %v125, 96
    %v347 = vpop.permute.xlu0 %346
    %v351 = vrot.slane %v307, 7
    %v352 = vsel %vm70, %v351, %v306
    %353 = vrot.lane.b32.xlu0 %v352, 112
    %v354 = vpop.permute.xlu0 %353
    %v358 = vrot.slane %v309, 7
    %v359 = vsel %vm70, %v358, %v308
    %361 = vrot.lane.b32.xlu0 %v144, 16
    %v362 = vpop.permute.xlu0 %361
    %v366 = vrot.slane %v311, 7
    %v367 = vsel %vm70, %v366, %v310
    %368 = vrot.lane.b32.xlu0 %v367, 32
    %v369 = vpop.permute.xlu0 %368
    %v373 = vrot.slane %v313, 7
    %v374 = vsel %vm70, %v373, %v312
    %375 = vrot.lane.b32.xlu0 %v374, 48
    %v376 = vpop.permute.xlu0 %375
    %v378 = vsel %vm148, %v83, %v320
    %v379 = vsel %vm150, %v378, %v327
    %v380 = vsel %vm152, %v379, %v330
    %v381 = vsel %vm154, %v380, %v337
    %v382 = vsel %vm156, %v381, %v344
    %v383 = vsel %vm158, %v382, %v347
    %v384 = vsel %vm160, %v383, %v354
    %v385 = vsel %vm148, %v359, %v362
    %v386 = vsel %vm150, %v385, %v369
    %v387 = vsel %vm152, %v386, %v376
    %v388 = vpack.c.bf16 %v384, %v384
    %v389 = vpack.c.bf16 %v387, %v387
    %v391 = vsel %vm154, %v389, 0
    %393 = vmatpush.bf16.msra.mxu0 %v250
    %394 = vmatpush.bf16.msra.mxu0 %v249
    %395 = vmatpush.bf16.msra.mxu0 %v248
    %396 = vmatpush.bf16.msra.mxu0 %v247
    %397 = vmatpush.bf16.msra.mxu0 %v246
    %398 = vmatpush.bf16.msra.mxu0 %v245
    %399 = vmatpush.bf16.msra.mxu0 %v244
    %400 = vmatpush.bf16.msra.mxu0 %v243
    %401 = vmatmul.bf16.gmra.mxu0 %v388
    %v402 = vpop.f32.mrf.mxu0
    %v403 = vadd.f32 %v193, %v402
    %v404 = vpop.f32.mrf.mxu0
    %405 = vdwg.mxu0
    %406 = vmatpush.bf16.msra.mxu0 0
    %407 = vmatpush.bf16.msra.mxu0 0
    %408 = vmatpush.bf16.msra.mxu0 0
    %409 = vmatpush.bf16.msra.mxu0 0
    %410 = vmatpush.bf16.msra.mxu0 %v254
    %411 = vmatpush.bf16.msra.mxu0 %v253
    %412 = vmatpush.bf16.msra.mxu0 %v252
    %413 = vmatpush.bf16.msra.mxu0 %v251
    %414 = vmatmul.bf16.gmra.mxu0 %v391
    %v415 = vpop.f32.mrf.mxu0
    %v416 = vadd.f32 %v403, %v415
    %v417 = vpop.f32.mrf.mxu0
    %418 = vdwg.mxu0
    %v419 = vmax.f32 %v416, 0.0
    %v420 = vpack.c.bf16 %v419, %v419
    %v421 = vld [vmem:[%s0 + $0x5] sm:$0x1]
    %v422 = vld [vmem:[%s0 + $0x45] sm:$0x1]
    %v423 = vld [vmem:[%s0 + $0x6] sm:$0x1]
    %v424 = vld [vmem:[%s0 + $0x46] sm:$0x1]
    %v425 = vld [vmem:[%s46 + $0x5] sm:$0x1]
    %v426 = vld [vmem:[%s46 + $0x45] sm:$0x1]
    %v427 = vld [vmem:[%s46 + $0x6] sm:$0x1]
    %v428 = vld [vmem:[%s46 + $0x46] sm:$0x1]
    %v429 = vld [vmem:[%s53 + $0x5] sm:$0x1]
    %v430 = vld [vmem:[%s53 + $0x45] sm:$0x1]
    %v431 = vld [vmem:[%s53 + $0x6] sm:$0x1]
    %v432 = vld [vmem:[%s53 + $0x46] sm:$0x1]
    %v433 = vld [vmem:[%s60 + $0x5] sm:$0x1]
    %v434 = vld [vmem:[%s60 + $0x45] sm:$0x1]
    %v435 = vld [vmem:[%s60 + $0x6] sm:$0x1]
    %v436 = vld [vmem:[%s60 + $0x46] sm:$0x1]
    %v440 = vrot.slane %v422, 7
    %v441 = vsel %vm70, %v440, %v421
    %442 = vrot.lane.b32.xlu0 %v441, 16
    %v443 = vpop.permute.xlu0 %442
    %v447 = vrot.slane %v424, 7
    %v448 = vsel %vm70, %v447, %v423
    %449 = vrot.lane.b32.xlu0 %v448, 32
    %v450 = vpop.permute.xlu0 %449
    %452 = vrot.lane.b32.xlu0 %v342, 48
    %v453 = vpop.permute.xlu0 %452
    %v457 = vrot.slane %v426, 7
    %v458 = vsel %vm70, %v457, %v425
    %459 = vrot.lane.b32.xlu0 %v458, 64
    %v460 = vpop.permute.xlu0 %459
    %v464 = vrot.slane %v428, 7
    %v465 = vsel %vm70, %v464, %v427
    %466 = vrot.lane.b32.xlu0 %v465, 80
    %v467 = vpop.permute.xlu0 %466
    %469 = vrot.lane.b32.xlu0 %v359, 96
    %v470 = vpop.permute.xlu0 %469
    %v474 = vrot.slane %v430, 7
    %v475 = vsel %vm70, %v474, %v429
    %476 = vrot.lane.b32.xlu0 %v475, 112
    %v477 = vpop.permute.xlu0 %476
    %v481 = vrot.slane %v432, 7
    %v482 = vsel %vm70, %v481, %v431
    %484 = vrot.lane.b32.xlu0 %v374, 16
    %v485 = vpop.permute.xlu0 %484
    %v489 = vrot.slane %v434, 7
    %v490 = vsel %vm70, %v489, %v433
    %491 = vrot.lane.b32.xlu0 %v490, 32
    %v492 = vpop.permute.xlu0 %491
    %v496 = vrot.slane %v436, 7
    %v497 = vsel %vm70, %v496, %v435
    %498 = vrot.lane.b32.xlu0 %v497, 48
    %v499 = vpop.permute.xlu0 %498
    %v501 = vsel %vm148, %v325, %v443
    %v502 = vsel %vm150, %v501, %v450
    %v503 = vsel %vm152, %v502, %v453
    %v504 = vsel %vm154, %v503, %v460
    %v505 = vsel %vm156, %v504, %v467
    %v506 = vsel %vm158, %v505, %v470
    %v507 = vsel %vm160, %v506, %v477
    %v508 = vsel %vm148, %v482, %v485
    %v509 = vsel %vm150, %v508, %v492
    %v510 = vsel %vm152, %v509, %v499
    %v511 = vpack.c.bf16 %v507, %v507
    %v512 = vpack.c.bf16 %v510, %v510
    %v514 = vsel %vm154, %v512, 0
    %516 = vmatpush.bf16.msra.mxu0 %v250
    %517 = vmatpush.bf16.msra.mxu0 %v249
    %518 = vmatpush.bf16.msra.mxu0 %v248
    %519 = vmatpush.bf16.msra.mxu0 %v247
    %520 = vmatpush.bf16.msra.mxu0 %v246
    %521 = vmatpush.bf16.msra.mxu0 %v245
    %522 = vmatpush.bf16.msra.mxu0 %v244
    %523 = vmatpush.bf16.msra.mxu0 %v243
    %524 = vmatmul.bf16.gmra.mxu0 %v511
    %v525 = vpop.f32.mrf.mxu0
    %v526 = vadd.f32 %v193, %v525
    %v527 = vpop.f32.mrf.mxu0
    %528 = vdwg.mxu0
    %529 = vmatpush.bf16.msra.mxu0 0
    %530 = vmatpush.bf16.msra.mxu0 0
    %531 = vmatpush.bf16.msra.mxu0 0
    %532 = vmatpush.bf16.msra.mxu0 0
    %533 = vmatpush.bf16.msra.mxu0 %v254
    %534 = vmatpush.bf16.msra.mxu0 %v253
    %535 = vmatpush.bf16.msra.mxu0 %v252
    %536 = vmatpush.bf16.msra.mxu0 %v251
    %537 = vmatmul.bf16.gmra.mxu0 %v514
    %v538 = vpop.f32.mrf.mxu0
    %v539 = vadd.f32 %v526, %v538
    %v540 = vpop.f32.mrf.mxu0
    %541 = vdwg.mxu0
    %v542 = vmax.f32 %v539, 0.0
    %v543 = vpack.c.bf16 %v542, %v542
    %v544 = vld [vmem:[%s0 + $0x7] sm:$0x1]
    %v545 = vld [vmem:[%s0 + $0x47] sm:$0x1]
    %v546 = vld [vmem:[%s0 + $0x8] sm:$0x1]
    %v547 = vld [vmem:[%s0 + $0x48] sm:$0x1]
    %v548 = vld [vmem:[%s46 + $0x7] sm:$0x1]
    %v549 = vld [vmem:[%s46 + $0x47] sm:$0x1]
    %v550 = vld [vmem:[%s46 + $0x8] sm:$0x1]
    %v551 = vld [vmem:[%s46 + $0x48] sm:$0x1]
    %v552 = vld [vmem:[%s53 + $0x7] sm:$0x1]
    %v553 = vld [vmem:[%s53 + $0x47] sm:$0x1]
    %v554 = vld [vmem:[%s53 + $0x8] sm:$0x1]
    %v555 = vld [vmem:[%s53 + $0x48] sm:$0x1]
    %v556 = vld [vmem:[%s60 + $0x7] sm:$0x1]
    %v557 = vld [vmem:[%s60 + $0x47] sm:$0x1]
    %v558 = vld [vmem:[%s60 + $0x8] sm:$0x1]
    %v559 = vld [vmem:[%s60 + $0x48] sm:$0x1]
    %v563 = vrot.slane %v545, 7
    %v564 = vsel %vm70, %v563, %v544
    %565 = vrot.lane.b32.xlu0 %v564, 16
    %v566 = vpop.permute.xlu0 %565
    %v570 = vrot.slane %v547, 7
    %v571 = vsel %vm70, %v570, %v546
    %572 = vrot.lane.b32.xlu0 %v571, 32
    %v573 = vpop.permute.xlu0 %572
    %575 = vrot.lane.b32.xlu0 %v465, 48
    %v576 = vpop.permute.xlu0 %575
    %v580 = vrot.slane %v549, 7
    %v581 = vsel %vm70, %v580, %v548
    %582 = vrot.lane.b32.xlu0 %v581, 64
    %v583 = vpop.permute.xlu0 %582
    %v587 = vrot.slane %v551, 7
    %v588 = vsel %vm70, %v587, %v550
    %589 = vrot.lane.b32.xlu0 %v588, 80
    %v590 = vpop.permute.xlu0 %589
    %592 = vrot.lane.b32.xlu0 %v482, 96
    %v593 = vpop.permute.xlu0 %592
    %v597 = vrot.slane %v553, 7
    %v598 = vsel %vm70, %v597, %v552
    %599 = vrot.lane.b32.xlu0 %v598, 112
    %v600 = vpop.permute.xlu0 %599
    %v604 = vrot.slane %v555, 7
    %v605 = vsel %vm70, %v604, %v554
    %607 = vrot.lane.b32.xlu0 %v497, 16
    %v608 = vpop.permute.xlu0 %607
    %v612 = vrot.slane %v557, 7
    %v613 = vsel %vm70, %v612, %v556
    %614 = vrot.lane.b32.xlu0 %v613, 32
    %v615 = vpop.permute.xlu0 %614
    %v619 = vrot.slane %v559, 7
    %v620 = vsel %vm70, %v619, %v558
    %621 = vrot.lane.b32.xlu0 %v620, 48
    %v622 = vpop.permute.xlu0 %621
    %v624 = vsel %vm148, %v448, %v566
    %v625 = vsel %vm150, %v624, %v573
    %v626 = vsel %vm152, %v625, %v576
    %v627 = vsel %vm154, %v626, %v583
    %v628 = vsel %vm156, %v627, %v590
    %v629 = vsel %vm158, %v628, %v593
    %v630 = vsel %vm160, %v629, %v600
    %v631 = vsel %vm148, %v605, %v608
    %v632 = vsel %vm150, %v631, %v615
    %v633 = vsel %vm152, %v632, %v622
    %v634 = vpack.c.bf16 %v630, %v630
    %v635 = vpack.c.bf16 %v633, %v633
    %v637 = vsel %vm154, %v635, 0
    %639 = vmatpush.bf16.msra.mxu0 %v250
    %640 = vmatpush.bf16.msra.mxu0 %v249
    %641 = vmatpush.bf16.msra.mxu0 %v248
    %642 = vmatpush.bf16.msra.mxu0 %v247
    %643 = vmatpush.bf16.msra.mxu0 %v246
    %644 = vmatpush.bf16.msra.mxu0 %v245
    %645 = vmatpush.bf16.msra.mxu0 %v244
    %646 = vmatpush.bf16.msra.mxu0 %v243
    %647 = vmatmul.bf16.gmra.mxu0 %v634
    %v648 = vpop.f32.mrf.mxu0
    %v649 = vadd.f32 %v193, %v648
    %v650 = vpop.f32.mrf.mxu0
    %651 = vdwg.mxu0
    %652 = vmatpush.bf16.msra.mxu0 0
    %653 = vmatpush.bf16.msra.mxu0 0
    %654 = vmatpush.bf16.msra.mxu0 0
    %655 = vmatpush.bf16.msra.mxu0 0
    %656 = vmatpush.bf16.msra.mxu0 %v254
    %657 = vmatpush.bf16.msra.mxu0 %v253
    %658 = vmatpush.bf16.msra.mxu0 %v252
    %659 = vmatpush.bf16.msra.mxu0 %v251
    %660 = vmatmul.bf16.gmra.mxu0 %v637
    %v661 = vpop.f32.mrf.mxu0
    %v662 = vadd.f32 %v649, %v661
    %v663 = vpop.f32.mrf.mxu0
    %664 = vdwg.mxu0
    %v665 = vmax.f32 %v662, 0.0
    %v666 = vpack.c.bf16 %v665, %v665
    %v667 = vld [vmem:[%s0 + $0x9] sm:$0x1]
    %v668 = vld [vmem:[%s0 + $0x49] sm:$0x1]
    %v669 = vld [vmem:[%s0 + $0xa] sm:$0x1]
    %v670 = vld [vmem:[%s0 + $0x4a] sm:$0x1]
    %v671 = vld [vmem:[%s46 + $0x9] sm:$0x1]
    %v672 = vld [vmem:[%s46 + $0x49] sm:$0x1]
    %v673 = vld [vmem:[%s46 + $0xa] sm:$0x1]
    %v674 = vld [vmem:[%s46 + $0x4a] sm:$0x1]
    %v675 = vld [vmem:[%s53 + $0x9] sm:$0x1]
    %v676 = vld [vmem:[%s53 + $0x49] sm:$0x1]
    %v677 = vld [vmem:[%s53 + $0xa] sm:$0x1]
    %v678 = vld [vmem:[%s53 + $0x4a] sm:$0x1]
    %v679 = vld [vmem:[%s60 + $0x9] sm:$0x1]
    %v680 = vld [vmem:[%s60 + $0x49] sm:$0x1]
    %v681 = vld [vmem:[%s60 + $0xa] sm:$0x1]
    %v682 = vld [vmem:[%s60 + $0x4a] sm:$0x1]
    %v686 = vrot.slane %v668, 7
    %v687 = vsel %vm70, %v686, %v667
    %688 = vrot.lane.b32.xlu0 %v687, 16
    %v689 = vpop.permute.xlu0 %688
    %v693 = vrot.slane %v670, 7
    %v694 = vsel %vm70, %v693, %v669
    %695 = vrot.lane.b32.xlu0 %v694, 32
    %v696 = vpop.permute.xlu0 %695
    %698 = vrot.lane.b32.xlu0 %v588, 48
    %v699 = vpop.permute.xlu0 %698
    %v703 = vrot.slane %v672, 7
    %v704 = vsel %vm70, %v703, %v671
    %705 = vrot.lane.b32.xlu0 %v704, 64
    %v706 = vpop.permute.xlu0 %705
    %v710 = vrot.slane %v674, 7
    %v711 = vsel %vm70, %v710, %v673
    %712 = vrot.lane.b32.xlu0 %v711, 80
    %v713 = vpop.permute.xlu0 %712
    %715 = vrot.lane.b32.xlu0 %v605, 96
    %v716 = vpop.permute.xlu0 %715
    %v720 = vrot.slane %v676, 7
    %v721 = vsel %vm70, %v720, %v675
    %722 = vrot.lane.b32.xlu0 %v721, 112
    %v723 = vpop.permute.xlu0 %722
    %v727 = vrot.slane %v678, 7
    %v728 = vsel %vm70, %v727, %v677
    %730 = vrot.lane.b32.xlu0 %v620, 16
    %v731 = vpop.permute.xlu0 %730
    %v735 = vrot.slane %v680, 7
    %v736 = vsel %vm70, %v735, %v679
    %737 = vrot.lane.b32.xlu0 %v736, 32
    %v738 = vpop.permute.xlu0 %737
    %v742 = vrot.slane %v682, 7
    %v743 = vsel %vm70, %v742, %v681
    %744 = vrot.lane.b32.xlu0 %v743, 48
    %v745 = vpop.permute.xlu0 %744
    %v747 = vsel %vm148, %v571, %v689
    %v748 = vsel %vm150, %v747, %v696
    %v749 = vsel %vm152, %v748, %v699
    %v750 = vsel %vm154, %v749, %v706
    %v751 = vsel %vm156, %v750, %v713
    %v752 = vsel %vm158, %v751, %v716
    %v753 = vsel %vm160, %v752, %v723
    %v754 = vsel %vm148, %v728, %v731
    %v755 = vsel %vm150, %v754, %v738
    %v756 = vsel %vm152, %v755, %v745
    %v757 = vpack.c.bf16 %v753, %v753
    %v758 = vpack.c.bf16 %v756, %v756
    %v760 = vsel %vm154, %v758, 0
    %762 = vmatpush.bf16.msra.mxu0 %v250
    %763 = vmatpush.bf16.msra.mxu0 %v249
    %764 = vmatpush.bf16.msra.mxu0 %v248
    %765 = vmatpush.bf16.msra.mxu0 %v247
    %766 = vmatpush.bf16.msra.mxu0 %v246
    %767 = vmatpush.bf16.msra.mxu0 %v245
    %768 = vmatpush.bf16.msra.mxu0 %v244
    %769 = vmatpush.bf16.msra.mxu0 %v243
    %770 = vmatmul.bf16.gmra.mxu0 %v757
    %v771 = vpop.f32.mrf.mxu0
    %v772 = vadd.f32 %v193, %v771
    %v773 = vpop.f32.mrf.mxu0
    %774 = vdwg.mxu0
    %775 = vmatpush.bf16.msra.mxu0 0
    %776 = vmatpush.bf16.msra.mxu0 0
    %777 = vmatpush.bf16.msra.mxu0 0
    %778 = vmatpush.bf16.msra.mxu0 0
    %779 = vmatpush.bf16.msra.mxu0 %v254
    %780 = vmatpush.bf16.msra.mxu0 %v253
    %781 = vmatpush.bf16.msra.mxu0 %v252
    %782 = vmatpush.bf16.msra.mxu0 %v251
    %783 = vmatmul.bf16.gmra.mxu0 %v760
    %v784 = vpop.f32.mrf.mxu0
    %v785 = vadd.f32 %v772, %v784
    %v786 = vpop.f32.mrf.mxu0
    %787 = vdwg.mxu0
    %v788 = vmax.f32 %v785, 0.0
    %v789 = vpack.c.bf16 %v788, %v788
    %v790 = vld [vmem:[%s0 + $0xb] sm:$0x1]
    %v791 = vld [vmem:[%s0 + $0x4b] sm:$0x1]
    %v792 = vld [vmem:[%s0 + $0xc] sm:$0x1]
    %v793 = vld [vmem:[%s0 + $0x4c] sm:$0x1]
    %v794 = vld [vmem:[%s46 + $0xb] sm:$0x1]
    %v795 = vld [vmem:[%s46 + $0x4b] sm:$0x1]
    %v796 = vld [vmem:[%s46 + $0xc] sm:$0x1]
    %v797 = vld [vmem:[%s46 + $0x4c] sm:$0x1]
    %v798 = vld [vmem:[%s53 + $0xb] sm:$0x1]
    %v799 = vld [vmem:[%s53 + $0x4b] sm:$0x1]
    %v800 = vld [vmem:[%s53 + $0xc] sm:$0x1]
    %v801 = vld [vmem:[%s53 + $0x4c] sm:$0x1]
    %v802 = vld [vmem:[%s60 + $0xb] sm:$0x1]
    %v803 = vld [vmem:[%s60 + $0x4b] sm:$0x1]
    %v804 = vld [vmem:[%s60 + $0xc] sm:$0x1]
    %v805 = vld [vmem:[%s60 + $0x4c] sm:$0x1]
    %v809 = vrot.slane %v791, 7
    %v810 = vsel %vm70, %v809, %v790
    %811 = vrot.lane.b32.xlu0 %v810, 16
    %v812 = vpop.permute.xlu0 %811
    %v816 = vrot.slane %v793, 7
    %v817 = vsel %vm70, %v816, %v792
    %818 = vrot.lane.b32.xlu0 %v817, 32
    %v819 = vpop.permute.xlu0 %818
    %821 = vrot.lane.b32.xlu0 %v711, 48
    %v822 = vpop.permute.xlu0 %821
    %v826 = vrot.slane %v795, 7
    %v827 = vsel %vm70, %v826, %v794
    %828 = vrot.lane.b32.xlu0 %v827, 64
    %v829 = vpop.permute.xlu0 %828
    %v833 = vrot.slane %v797, 7
    %v834 = vsel %vm70, %v833, %v796
    %835 = vrot.lane.b32.xlu0 %v834, 80
    %v836 = vpop.permute.xlu0 %835
    %838 = vrot.lane.b32.xlu0 %v728, 96
    %v839 = vpop.permute.xlu0 %838
    %v843 = vrot.slane %v799, 7
    %v844 = vsel %vm70, %v843, %v798
    %845 = vrot.lane.b32.xlu0 %v844, 112
    %v846 = vpop.permute.xlu0 %845
    %v850 = vrot.slane %v801, 7
    %v851 = vsel %vm70, %v850, %v800
    %853 = vrot.lane.b32.xlu0 %v743, 16
    %v854 = vpop.permute.xlu0 %853
    %v858 = vrot.slane %v803, 7
    %v859 = vsel %vm70, %v858, %v802
    %860 = vrot.lane.b32.xlu0 %v859, 32
    %v861 = vpop.permute.xlu0 %860
    %v865 = vrot.slane %v805, 7
    %v866 = vsel %vm70, %v865, %v804
    %867 = vrot.lane.b32.xlu0 %v866, 48
    %v868 = vpop.permute.xlu0 %867
    %v870 = vsel %vm148, %v694, %v812
    %v871 = vsel %vm150, %v870, %v819
    %v872 = vsel %vm152, %v871, %v822
    %v873 = vsel %vm154, %v872, %v829
    %v874 = vsel %vm156, %v873, %v836
    %v875 = vsel %vm158, %v874, %v839
    %v876 = vsel %vm160, %v875, %v846
    %v877 = vsel %vm148, %v851, %v854
    %v878 = vsel %vm150, %v877, %v861
    %v879 = vsel %vm152, %v878, %v868
    %v880 = vpack.c.bf16 %v876, %v876
    %v881 = vpack.c.bf16 %v879, %v879
    %v883 = vsel %vm154, %v881, 0
    %885 = vmatpush.bf16.msra.mxu0 %v250
    %886 = vmatpush.bf16.msra.mxu0 %v249
    %887 = vmatpush.bf16.msra.mxu0 %v248
    %888 = vmatpush.bf16.msra.mxu0 %v247
    %889 = vmatpush.bf16.msra.mxu0 %v246
    %890 = vmatpush.bf16.msra.mxu0 %v245
    %891 = vmatpush.bf16.msra.mxu0 %v244
    %892 = vmatpush.bf16.msra.mxu0 %v243
    %893 = vmatmul.bf16.gmra.mxu0 %v880
    %v894 = vpop.f32.mrf.mxu0
    %v895 = vadd.f32 %v193, %v894
    %v896 = vpop.f32.mrf.mxu0
    %897 = vdwg.mxu0
    %898 = vmatpush.bf16.msra.mxu0 0
    %899 = vmatpush.bf16.msra.mxu0 0
    %900 = vmatpush.bf16.msra.mxu0 0
    %901 = vmatpush.bf16.msra.mxu0 0
    %902 = vmatpush.bf16.msra.mxu0 %v254
    %903 = vmatpush.bf16.msra.mxu0 %v253
    %904 = vmatpush.bf16.msra.mxu0 %v252
    %905 = vmatpush.bf16.msra.mxu0 %v251
    %906 = vmatmul.bf16.gmra.mxu0 %v883
    %v907 = vpop.f32.mrf.mxu0
    %v908 = vadd.f32 %v895, %v907
    %v909 = vpop.f32.mrf.mxu0
    %910 = vdwg.mxu0
    %v911 = vmax.f32 %v908, 0.0
    %v912 = vpack.c.bf16 %v911, %v911
    %v913 = vld [vmem:[%s0 + $0xd] sm:$0x1]
    %v914 = vld [vmem:[%s0 + $0x4d] sm:$0x1]
    %v915 = vld [vmem:[%s0 + $0xe] sm:$0x1]
    %v916 = vld [vmem:[%s0 + $0x4e] sm:$0x1]
    %v917 = vld [vmem:[%s46 + $0xd] sm:$0x1]
    %v918 = vld [vmem:[%s46 + $0x4d] sm:$0x1]
    %v919 = vld [vmem:[%s46 + $0xe] sm:$0x1]
    %v920 = vld [vmem:[%s46 + $0x4e] sm:$0x1]
    %v921 = vld [vmem:[%s53 + $0xd] sm:$0x1]
    %v922 = vld [vmem:[%s53 + $0x4d] sm:$0x1]
    %v923 = vld [vmem:[%s53 + $0xe] sm:$0x1]
    %v924 = vld [vmem:[%s53 + $0x4e] sm:$0x1]
    %v925 = vld [vmem:[%s60 + $0xd] sm:$0x1]
    %v926 = vld [vmem:[%s60 + $0x4d] sm:$0x1]
    %v927 = vld [vmem:[%s60 + $0xe] sm:$0x1]
    %v928 = vld [vmem:[%s60 + $0x4e] sm:$0x1]
    %v932 = vrot.slane %v914, 7
    %v933 = vsel %vm70, %v932, %v913
    %934 = vrot.lane.b32.xlu0 %v933, 16
    %v935 = vpop.permute.xlu0 %934
    %v939 = vrot.slane %v916, 7
    %v940 = vsel %vm70, %v939, %v915
    %941 = vrot.lane.b32.xlu0 %v940, 32
    %v942 = vpop.permute.xlu0 %941
    %944 = vrot.lane.b32.xlu0 %v834, 48
    %v945 = vpop.permute.xlu0 %944
    %v949 = vrot.slane %v918, 7
    %v950 = vsel %vm70, %v949, %v917
    %951 = vrot.lane.b32.xlu0 %v950, 64
    %v952 = vpop.permute.xlu0 %951
    %v956 = vrot.slane %v920, 7
    %v957 = vsel %vm70, %v956, %v919
    %958 = vrot.lane.b32.xlu0 %v957, 80
    %v959 = vpop.permute.xlu0 %958
    %961 = vrot.lane.b32.xlu0 %v851, 96
    %v962 = vpop.permute.xlu0 %961
    %v966 = vrot.slane %v922, 7
    %v967 = vsel %vm70, %v966, %v921
    %968 = vrot.lane.b32.xlu0 %v967, 112
    %v969 = vpop.permute.xlu0 %968
    %v973 = vrot.slane %v924, 7
    %v974 = vsel %vm70, %v973, %v923
    %976 = vrot.lane.b32.xlu0 %v866, 16
    %v977 = vpop.permute.xlu0 %976
    %v981 = vrot.slane %v926, 7
    %v982 = vsel %vm70, %v981, %v925
    %983 = vrot.lane.b32.xlu0 %v982, 32
    %v984 = vpop.permute.xlu0 %983
    %v988 = vrot.slane %v928, 7
    %v989 = vsel %vm70, %v988, %v927
    %990 = vrot.lane.b32.xlu0 %v989, 48
    %v991 = vpop.permute.xlu0 %990
    %v993 = vsel %vm148, %v817, %v935
    %v994 = vsel %vm150, %v993, %v942
    %v995 = vsel %vm152, %v994, %v945
    %v996 = vsel %vm154, %v995, %v952
    %v997 = vsel %vm156, %v996, %v959
    %v998 = vsel %vm158, %v997, %v962
    %v999 = vsel %vm160, %v998, %v969
    %v1000 = vsel %vm148, %v974, %v977
    %v1001 = vsel %vm150, %v1000, %v984
    %v1002 = vsel %vm152, %v1001, %v991
    %v1003 = vpack.c.bf16 %v999, %v999
    %v1004 = vpack.c.bf16 %v1002, %v1002
    %v1006 = vsel %vm154, %v1004, 0
    %1008 = vmatpush.bf16.msra.mxu0 %v250
    %1009 = vmatpush.bf16.msra.mxu0 %v249
    %1010 = vmatpush.bf16.msra.mxu0 %v248
    %1011 = vmatpush.bf16.msra.mxu0 %v247
    %1012 = vmatpush.bf16.msra.mxu0 %v246
    %1013 = vmatpush.bf16.msra.mxu0 %v245
    %1014 = vmatpush.bf16.msra.mxu0 %v244
    %1015 = vmatpush.bf16.msra.mxu0 %v243
    %1016 = vmatmul.bf16.gmra.mxu0 %v1003
    %v1017 = vpop.f32.mrf.mxu0
    %v1018 = vadd.f32 %v193, %v1017
    %v1019 = vpop.f32.mrf.mxu0
    %1020 = vdwg.mxu0
    %1021 = vmatpush.bf16.msra.mxu0 0
    %1022 = vmatpush.bf16.msra.mxu0 0
    %1023 = vmatpush.bf16.msra.mxu0 0
    %1024 = vmatpush.bf16.msra.mxu0 0
    %1025 = vmatpush.bf16.msra.mxu0 %v254
    %1026 = vmatpush.bf16.msra.mxu0 %v253
    %1027 = vmatpush.bf16.msra.mxu0 %v252
    %1028 = vmatpush.bf16.msra.mxu0 %v251
    %1029 = vmatmul.bf16.gmra.mxu0 %v1006
    %v1030 = vpop.f32.mrf.mxu0
    %v1031 = vadd.f32 %v1018, %v1030
    %v1032 = vpop.f32.mrf.mxu0
    %1033 = vdwg.mxu0
    %v1034 = vmax.f32 %v1031, 0.0
    %v1035 = vpack.c.bf16 %v1034, %v1034
    %v1037 = vunpack.c.l.b16 %v420
    %v1038 = vpack.c.b16 %v1037, %v1037
    %1039 = vrot.lane.b32.xlu0 %v1038, 56
    %v1040 = vpop.permute.xlu0 %1039
    %v1042 = vunpack.c.l.b16 %v543
    %v1043 = vpack.c.b16 %v1042, %v1042
    %1044 = vrot.lane.b32.xlu0 %v1043, 112
    %v1045 = vpop.permute.xlu0 %1044
    %vm1046 = vcmask 457728
    %v1049 = vsel %vm1046, %v297, %v1040
    %v1051 = vsel %vm160, %v1049, %v1045
    %v1053 = vld [vmem:[%s3] sm:$0xf]
    %v1054 = vld [vmem:[%s3 + $0x4] sm:$0xf]
    %v1055 = vld [vmem:[%s3 + $0x8] sm:$0xf]
    %v1056 = vld [vmem:[%s3 + $0xc] sm:$0xf]
    %v1057 = vld [vmem:[%s3 + $0x10] sm:$0xf]
    %v1058 = vld [vmem:[%s3 + $0x14] sm:$0xf]
    %v1059 = vld [vmem:[%s3 + $0x18] sm:$0xf]
    %v1060 = vld [vmem:[%s3 + $0x1c] sm:$0xf]
    %v1061 = vld [vmem:[%s3 + $0x20] sm:$0xf]
    %v1062 = vld [vmem:[%s3 + $0x24] sm:$0xf]
    %v1063 = vld [vmem:[%s3 + $0x28] sm:$0xf]
    %v1064 = vld [vmem:[%s3 + $0x2c] sm:$0xf]
    %v1065 = vld [vmem:[%s3 + $0x30] sm:$0xf]
    %v1066 = vld [vmem:[%s3 + $0x34] sm:$0xf]
    %v1067 = vld [vmem:[%s3 + $0x38] sm:$0xf]
    %v1068 = vld [vmem:[%s3 + $0x3c] sm:$0xf]
    %v1069 = vld [vmem:[%s3 + $0x40] sm:$0xf]
    %v1070 = vld [vmem:[%s3 + $0x44] sm:$0xf]
    %v1071 = vld [vmem:[%s3 + $0x48] sm:$0xf]
    %v1072 = vld [vmem:[%s3 + $0x4c] sm:$0xf]
    %v1073 = vld [vmem:[%s3 + $0x50] sm:$0xf]
    %v1074 = vld [vmem:[%s4] sm:$0x1]
    %v1076 = vperm.slane %v1074, 0
    %v1099 = vunpack.c.l.b16 %v1053
    %v1100 = vunpack.c.l.b16 %v1054
    %v1101 = vunpack.c.l.b16 %v1055
    %v1102 = vunpack.c.l.b16 %v1056
    %v1103 = vunpack.c.l.b16 %v1057
    %v1104 = vunpack.c.l.b16 %v1058
    %v1105 = vunpack.c.l.b16 %v1059
    %v1106 = vunpack.c.l.b16 %v1060
    %v1107 = vunpack.c.l.b16 %v1061
    %v1108 = vunpack.c.l.b16 %v1062
    %v1109 = vunpack.c.l.b16 %v1063
    %v1110 = vunpack.c.l.b16 %v1064
    %v1111 = vunpack.c.l.b16 %v1065
    %v1112 = vunpack.c.l.b16 %v1066
    %v1113 = vunpack.c.l.b16 %v1067
    %v1114 = vunpack.c.l.b16 %v1068
    %v1115 = vunpack.c.l.b16 %v1069
    %v1116 = vunpack.c.l.b16 %v1070
    %v1117 = vunpack.c.l.b16 %v1071
    %v1118 = vunpack.c.l.b16 %v1072
    %v1119 = vunpack.c.l.b16 %v1073
    %v1120 = vpack.c.b16 %v1100, %v1099
    %v1121 = vpack.c.b16 %v1102, %v1101
    %v1122 = vpack.c.b16 %v1104, %v1103
    %v1123 = vpack.c.b16 %v1106, %v1105
    %v1124 = vpack.c.b16 %v1108, %v1107
    %v1125 = vpack.c.b16 %v1110, %v1109
    %v1126 = vpack.c.b16 %v1112, %v1111
    %v1127 = vpack.c.b16 %v1114, %v1113
    %v1128 = vpack.c.b16 %v1116, %v1115
    %v1129 = vpack.c.b16 %v1118, %v1117
    %v1130 = vpack.c.b16 %v1119, %v1119
    %vm1141 = vcmask 326656
    %v1142 = vsel %vm1141, %v1045, 0
    %vm1144 = vcmask 1043456
    %v1146 = vsel %vm1144, %v1130, 0
    %1148 = vmatpush.bf16.msra.mxu0 %v1127
    %1149 = vmatpush.bf16.msra.mxu0 %v1126
    %1150 = vmatpush.bf16.msra.mxu0 %v1125
    %1151 = vmatpush.bf16.msra.mxu0 %v1124
    %1152 = vmatpush.bf16.msra.mxu0 %v1123
    %1153 = vmatpush.bf16.msra.mxu0 %v1122
    %1154 = vmatpush.bf16.msra.mxu0 %v1121
    %1155 = vmatpush.bf16.msra.mxu0 %v1120
    %1156 = vmatmul.bf16.gmra.mxu0 %v1051
    %v1157 = vpop.f32.mrf.mxu0
    %v1158 = vadd.f32 %v1076, %v1157
    %v1159 = vpop.f32.mrf.mxu0
    %1160 = vdwg.mxu0
    %1161 = vmatpush.bf16.msra.mxu0 0
    %1162 = vmatpush.bf16.msra.mxu0 0
    %1163 = vmatpush.bf16.msra.mxu0 0
    %1164 = vmatpush.bf16.msra.mxu0 0
    %1165 = vmatpush.bf16.msra.mxu0 0
    %1166 = vmatpush.bf16.msra.mxu0 %v1146
    %1167 = vmatpush.bf16.msra.mxu0 %v1129
    %1168 = vmatpush.bf16.msra.mxu0 %v1128
    %1169 = vmatmul.bf16.gmra.mxu0 %v1142
    %v1170 = vpop.f32.mrf.mxu0
    %v1171 = vadd.f32 %v1158, %v1170
    %v1172 = vpop.f32.mrf.mxu0
    %1173 = vdwg.mxu0
    %v1174 = vmax.f32 %v1171, 0.0
    %v1175 = vpack.c.bf16 %v1174, %v1174
    %v1176 = vld [vmem:[%s5] sm:$0xf]
    %v1177 = vld [vmem:[%s5 + $0x4] sm:$0xf]
    %v1178 = vld [vmem:[%s5 + $0x8] sm:$0xf]
    %v1179 = vld [vmem:[%s5 + $0xc] sm:$0xf]
    %v1180 = vld [vmem:[%s5 + $0x10] sm:$0xf]
    %v1181 = vld [vmem:[%s5 + $0x14] sm:$0xf]
    %v1183 = vunpack.c.l.b16 %v666
    %v1184 = vpack.c.b16 %v1183, %v1183
    %1185 = vrot.lane.b32.xlu0 %v1184, 56
    %v1186 = vpop.permute.xlu0 %1185
    %v1188 = vunpack.c.l.b16 %v789
    %v1189 = vpack.c.b16 %v1188, %v1188
    %1190 = vrot.lane.b32.xlu0 %v1189, 112
    %v1191 = vpop.permute.xlu0 %1190
    %v1194 = vsel %vm1046, %v543, %v1186
    %v1196 = vsel %vm160, %v1194, %v1191
    %v1198 = vsel %vm1141, %v1191, 0
    %1200 = vmatpush.bf16.msra.mxu0 %v1127
    %1201 = vmatpush.bf16.msra.mxu0 %v1126
    %1202 = vmatpush.bf16.msra.mxu0 %v1125
    %1203 = vmatpush.bf16.msra.mxu0 %v1124
    %1204 = vmatpush.bf16.msra.mxu0 %v1123
    %1205 = vmatpush.bf16.msra.mxu0 %v1122
    %1206 = vmatpush.bf16.msra.mxu0 %v1121
    %1207 = vmatpush.bf16.msra.mxu0 %v1120
    %1208 = vmatmul.bf16.gmra.mxu0 %v1196
    %v1209 = vpop.f32.mrf.mxu0
    %v1210 = vadd.f32 %v1076, %v1209
    %v1211 = vpop.f32.mrf.mxu0
    %1212 = vdwg.mxu0
    %1213 = vmatpush.bf16.msra.mxu0 0
    %1214 = vmatpush.bf16.msra.mxu0 0
    %1215 = vmatpush.bf16.msra.mxu0 0
    %1216 = vmatpush.bf16.msra.mxu0 0
    %1217 = vmatpush.bf16.msra.mxu0 0
    %1218 = vmatpush.bf16.msra.mxu0 %v1146
    %1219 = vmatpush.bf16.msra.mxu0 %v1129
    %1220 = vmatpush.bf16.msra.mxu0 %v1128
    %1221 = vmatmul.bf16.gmra.mxu0 %v1198
    %v1222 = vpop.f32.mrf.mxu0
    %v1223 = vadd.f32 %v1210, %v1222
    %v1224 = vpop.f32.mrf.mxu0
    %1225 = vdwg.mxu0
    %v1226 = vmax.f32 %v1223, 0.0
    %v1227 = vpack.c.bf16 %v1226, %v1226
    %v1228 = vld [vmem:[%s5 + $0x18] sm:$0xf]
    %v1229 = vld [vmem:[%s5 + $0x1c] sm:$0xf]
    %v1230 = vld [vmem:[%s5 + $0x20] sm:$0xf]
    %v1231 = vld [vmem:[%s5 + $0x24] sm:$0xf]
    %v1232 = vld [vmem:[%s5 + $0x28] sm:$0xf]
    %v1233 = vld [vmem:[%s5 + $0x2c] sm:$0xf]
    %v1240 = vunpack.c.l.b16 %v1228
    %v1241 = vunpack.c.l.b16 %v1229
    %v1242 = vunpack.c.l.b16 %v1230
    %v1243 = vunpack.c.l.b16 %v1231
    %v1244 = vunpack.c.l.b16 %v1232
    %v1245 = vunpack.c.l.b16 %v1233
    %v1246 = vpack.c.b16 %v1241, %v1240
    %v1247 = vpack.c.b16 %v1243, %v1242
    %v1248 = vpack.c.b16 %v1245, %v1244
    %v1253 = vsel %vm152, %v1227, 0
    %1255 = vmatpush.bf16.msra.mxu0 0
    %1256 = vmatpush.bf16.msra.mxu0 0
    %1257 = vmatpush.bf16.msra.mxu0 0
    %1258 = vmatpush.bf16.msra.mxu0 0
    %1259 = vmatpush.bf16.msra.mxu0 0
    %1260 = vmatpush.bf16.msra.mxu0 %v1248
    %1261 = vmatpush.bf16.msra.mxu0 %v1247
    %1262 = vmatpush.bf16.msra.mxu0 %v1246
    %1263 = vmatmul.bf16.gmra.mxu0 %v1253
    %v1264 = vpop.f32.mrf.mxu0
    %v1265 = vadd.f32 0.0, %v1264
    %v1266 = vpop.f32.mrf.mxu0
    %1267 = vdwg.mxu0
    %v1274 = vunpack.c.l.b16 %v1176
    %v1275 = vunpack.c.l.b16 %v1177
    %v1276 = vunpack.c.l.b16 %v1178
    %v1277 = vunpack.c.l.b16 %v1179
    %v1278 = vunpack.c.l.b16 %v1180
    %v1279 = vunpack.c.l.b16 %v1181
    %v1280 = vpack.c.b16 %v1275, %v1274
    %v1281 = vpack.c.b16 %v1277, %v1276
    %v1282 = vpack.c.b16 %v1279, %v1278
    %v1287 = vsel %vm152, %v1175, 0
    %1289 = vmatpush.bf16.msra.mxu0 0
    %1290 = vmatpush.bf16.msra.mxu0 0
    %1291 = vmatpush.bf16.msra.mxu0 0
    %1292 = vmatpush.bf16.msra.mxu0 0
    %1293 = vmatpush.bf16.msra.mxu0 0
    %1294 = vmatpush.bf16.msra.mxu0 %v1282
    %1295 = vmatpush.bf16.msra.mxu0 %v1281
    %1296 = vmatpush.bf16.msra.mxu0 %v1280
    %1297 = vmatmul.bf16.gmra.mxu0 %v1287
    %v1298 = vpop.f32.mrf.mxu0
    %v1299 = vadd.f32 %v1265, %v1298
    %v1300 = vpop.f32.mrf.mxu0
    %1301 = vdwg.mxu0
    %v1303 = vunpack.c.l.b16 %v912
    %v1304 = vpack.c.b16 %v1303, %v1303
    %1305 = vrot.lane.b32.xlu0 %v1304, 56
    %v1306 = vpop.permute.xlu0 %1305
    %v1308 = vunpack.c.l.b16 %v1035
    %v1309 = vpack.c.b16 %v1308, %v1308
    %1310 = vrot.lane.b32.xlu0 %v1309, 112
    %v1311 = vpop.permute.xlu0 %1310
    %v1314 = vsel %vm1046, %v789, %v1306
    %v1316 = vsel %vm160, %v1314, %v1311
    %v1318 = vsel %vm1141, %v1311, 0
    %1320 = vmatpush.bf16.msra.mxu0 %v1127
    %1321 = vmatpush.bf16.msra.mxu0 %v1126
    %1322 = vmatpush.bf16.msra.mxu0 %v1125
    %1323 = vmatpush.bf16.msra.mxu0 %v1124
    %1324 = vmatpush.bf16.msra.mxu0 %v1123
    %1325 = vmatpush.bf16.msra.mxu0 %v1122
    %1326 = vmatpush.bf16.msra.mxu0 %v1121
    %1327 = vmatpush.bf16.msra.mxu0 %v1120
    %1328 = vmatmul.bf16.gmra.mxu0 %v1316
    %v1329 = vpop.f32.mrf.mxu0
    %v1330 = vadd.f32 %v1076, %v1329
    %v1331 = vpop.f32.mrf.mxu0
    %1332 = vdwg.mxu0
    %1333 = vmatpush.bf16.msra.mxu0 0
    %1334 = vmatpush.bf16.msra.mxu0 0
    %1335 = vmatpush.bf16.msra.mxu0 0
    %1336 = vmatpush.bf16.msra.mxu0 0
    %1337 = vmatpush.bf16.msra.mxu0 0
    %1338 = vmatpush.bf16.msra.mxu0 %v1146
    %1339 = vmatpush.bf16.msra.mxu0 %v1129
    %1340 = vmatpush.bf16.msra.mxu0 %v1128
    %1341 = vmatmul.bf16.gmra.mxu0 %v1318
    %v1342 = vpop.f32.mrf.mxu0
    %v1343 = vadd.f32 %v1330, %v1342
    %v1344 = vpop.f32.mrf.mxu0
    %1345 = vdwg.mxu0
    %v1346 = vmax.f32 %v1343, 0.0
    %v1347 = vpack.c.bf16 %v1346, %v1346
    %v1348 = vld [vmem:[%s5 + $0x30] sm:$0xf]
    %v1349 = vld [vmem:[%s5 + $0x34] sm:$0xf]
    %v1350 = vld [vmem:[%s5 + $0x38] sm:$0xf]
    %v1351 = vld [vmem:[%s5 + $0x3c] sm:$0xf]
    %v1352 = vld [vmem:[%s5 + $0x40] sm:$0xf]
    %v1353 = vld [vmem:[%s5 + $0x44] sm:$0xf]
    %v1360 = vunpack.c.l.b16 %v1348
    %v1361 = vunpack.c.l.b16 %v1349
    %v1362 = vunpack.c.l.b16 %v1350
    %v1363 = vunpack.c.l.b16 %v1351
    %v1364 = vunpack.c.l.b16 %v1352
    %v1365 = vunpack.c.l.b16 %v1353
    %v1366 = vpack.c.b16 %v1361, %v1360
    %v1367 = vpack.c.b16 %v1363, %v1362
    %v1368 = vpack.c.b16 %v1365, %v1364
    %v1373 = vsel %vm152, %v1347, 0
    %1375 = vmatpush.bf16.msra.mxu0 0
    %1376 = vmatpush.bf16.msra.mxu0 0
    %1377 = vmatpush.bf16.msra.mxu0 0
    %1378 = vmatpush.bf16.msra.mxu0 0
    %1379 = vmatpush.bf16.msra.mxu0 0
    %1380 = vmatpush.bf16.msra.mxu0 %v1368
    %1381 = vmatpush.bf16.msra.mxu0 %v1367
    %1382 = vmatpush.bf16.msra.mxu0 %v1366
    %1383 = vmatmul.bf16.gmra.mxu0 %v1373
    %v1384 = vpop.f32.mrf.mxu0
    %v1385 = vadd.f32 0.0, %v1384
    %v1386 = vpop.f32.mrf.mxu0
    %1387 = vdwg.mxu0
    %v1388 = vadd.f32 %v1299, %v1385
    %v1389 = vld [vmem:[%s6] sm:$0x1]
    %v1391 = vperm.slane %v1389, 0
    %v1393 = vadd.f32 %v1388, %v1391
    %v1394 = vmax.f32 %v1393, 0.0
    %v1395 = vpack.c.bf16 %v1394, %v1394
    %v1396 = vld [vmem:[%s7] sm:$0xf]
    %v1397 = vld [vmem:[%s7 + $0x4] sm:$0xf]
    %v1398 = vld [vmem:[%s7 + $0x8] sm:$0xf]
    %v1399 = vld [vmem:[%s7 + $0xc] sm:$0xf]
    %v1400 = vld [vmem:[%s8] sm:$0x1]
    %v1402 = vperm.slane %v1400, 0
    %v1408 = vunpack.c.l.b16 %v1396
    %v1409 = vunpack.c.l.b16 %v1397
    %v1410 = vunpack.c.l.b16 %v1398
    %v1411 = vunpack.c.l.b16 %v1399
    %v1412 = vpack.c.b16 %v1409, %v1408
    %v1413 = vpack.c.b16 %v1411, %v1410
    %v1417 = vsel %vm150, %v1395, 0
    %1419 = vmatpush.bf16.msra.mxu0 0
    %1420 = vmatpush.bf16.msra.mxu0 0
    %1421 = vmatpush.bf16.msra.mxu0 0
    %1422 = vmatpush.bf16.msra.mxu0 0
    %1423 = vmatpush.bf16.msra.mxu0 0
    %1424 = vmatpush.bf16.msra.mxu0 0
    %1425 = vmatpush.bf16.msra.mxu0 %v1413
    %1426 = vmatpush.bf16.msra.mxu0 %v1412
    %1427 = vmatmul.bf16.gmra.mxu0 %v1417
    %v1428 = vpop.f32.mrf.mxu0
    %v1429 = vadd.f32 %v1402, %v1428
    %v1430 = vpop.f32.mrf.mxu0
    %1431 = vdwg.mxu0
    %v1432 = vmax.f32 %v1429, 0.0
    %v1433 = vpack.c.bf16 %v1432, %v1432
    %v1434 = vld [vmem:[%s9] sm:$0xf]
    %v1435 = vld [vmem:[%s9 + $0x4] sm:$0xf]
    %v1436 = vld [vmem:[%s9 + $0x8] sm:$0xf]
    %v1437 = vld [vmem:[%s9 + $0xc] sm:$0xf]
    %v1438 = vld [vmem:[%s10] sm:$0x1]
    %v1440 = vperm.slane %v1438, 0
    %v1446 = vunpack.c.l.b16 %v1434
    %v1447 = vunpack.c.l.b16 %v1435
    %v1448 = vunpack.c.l.b16 %v1436
    %v1449 = vunpack.c.l.b16 %v1437
    %v1450 = vpack.c.b16 %v1447, %v1446
    %v1451 = vpack.c.b16 %v1449, %v1448
    %v1455 = vsel %vm150, %v1433, 0
    %1457 = vmatpush.bf16.msra.mxu0 0
    %1458 = vmatpush.bf16.msra.mxu0 0
    %1459 = vmatpush.bf16.msra.mxu0 0
    %1460 = vmatpush.bf16.msra.mxu0 0
    %1461 = vmatpush.bf16.msra.mxu0 0
    %1462 = vmatpush.bf16.msra.mxu0 0
    %1463 = vmatpush.bf16.msra.mxu0 %v1451
    %1464 = vmatpush.bf16.msra.mxu0 %v1450
    %1465 = vmatmul.bf16.gmra.mxu0 %v1455
    %v1466 = vpop.f32.mrf.mxu0
    %v1467 = vadd.f32 %v1440, %v1466
    %v1468 = vpop.f32.mrf.mxu0
    %1469 = vdwg.mxu0
    %vm1470 = vcmask 41984
    %1471 = vst.msk [vmem:[#allocation2] sm:$0x3] %vm1470, %v1467
    // Predicated region
    $region46: #{tpu_custom_call.1} parent=1 // pred_check
      _
    $region47: #{tpu_custom_call.1} parent=1 // pred_check_branch
      %1473 = sbr.rel (0) target = $region49
    $region48: #{tpu_custom_call.1} parent=1 // pred_region
      %1475 = vsyncadd [#allocation3], 0
      %s1477 = sshll.u32 [#allocation2], 4
      %s1478 = int_to_ptr.vmem [resolvable:$true] %s1477
      %s1479 = sshll.u32 %s11, 4
      %s1480 = int_to_ptr.hbm [resolvable:$true] %s1479
      %1482 = dma.vmem_to_hbm [thread:$0]  %s1478, 32, %s1480, [#allocation3]
    $region49: #{tpu_custom_call.1} parent=1 // pred_fallthru
      _
    // Predicated region
    $region50: #{tpu_custom_call.1} parent=1 // pred_check
      _
    $region51: #{tpu_custom_call.1} parent=1 // pred_check_branch
      %1484 = sbr.rel (0) target = $region53
    $region52: #{tpu_custom_call.1} parent=1 // pred_region
      %1486 = dma.done [#allocation3], 32
    $region53: #{tpu_custom_call.1} parent=1 // pred_fallthru
      _
    %1487 = vsyncpa [#allocation3], 1

</llo_original>
